<compile_context>
chip_gen: v6e
topology: v6e:2x2x1
jax: 0.10.0
libtpu: 0.0.40
codegen_flags: <defaults>
</compile_context>

<pallas_src>
import jax
import jax.numpy as jnp
from jax import lax
from jax.experimental import pallas as pl
from jax.experimental.pallas import tpu as pltpu


# -------------------- Pallas kernel --------------------
def _lstm_tsp_kernel(x_ref, wih0_ref, b0_ref, wsh_ref, whh1_ref, b1_ref,
                     wfc_ref, bfc_ref, out_ref):
    TB, Din = x_ref.shape            # (T*Bp, Din)
    H4 = b0_ref.shape[1]             # 4H
    H = H4 // 4
    Bp = out_ref.shape[0]            # padded batch (sublane multiple)
    T = TB // Bp

    # ---- hoist all loads out of the recurrence (one vld each) ----
    x_all = x_ref[...]               # (T*Bp, Din)  f32
    wih0 = wih0_ref[...]             # (Din, 4H)    f32
    wsh = wsh_ref[...]               # (H, 8H)      [whh0^T | wih1^T], matmul dtype
    whh1 = whh1_ref[...]             # (H, 4H)
    wfc = wfc_ref[...]               # (H, S_pad)
    bfc = bfc_ref[...]               # (1, S_pad)   f32
    b1 = jnp.broadcast_to(b1_ref[...], (Bp, H4)).astype(jnp.float32)

    mm_dtype = wsh.dtype             # matmul operand dtype (bf16 by default)

    # ---- layer-0 input projection: Din VPU broadcast-FMAs (f32), hoisted ----
    # off the serial chain; avoids a degenerate (T*Bp,2)x(2,4H) MXU matmul.
    zx0 = jnp.broadcast_to(b0_ref[...], (TB, H4)).astype(jnp.float32)
    for d in range(Din):             # Din is static (=2)
        zx0 = zx0 + x_all[:, d:d + 1] * wih0[d:d + 1, :]

    def gates(z):
        # 2 full-width EUP passes on one (Bp,4H)=(8,128) vreg; slice results.
        sig = jax.nn.sigmoid(z)
        tnh = jnp.tanh(z)
        i = sig[:, 0 * H:1 * H]
        f = sig[:, 1 * H:2 * H]
        g = tnh[:, 2 * H:3 * H]
        o = sig[:, 3 * H:4 * H]
        return i, f, g, o

    # ---- recurrent state carried in vregs; loop fully unrolled (T static) ----
    h0 = jnp.zeros((Bp, H), jnp.float32)
    c0 = jnp.zeros((Bp, H), jnp.float32)
    h1 = jnp.zeros((Bp, H), jnp.float32)
    c1 = jnp.zeros((Bp, H), jnp.float32)
    r0 = jnp.zeros((Bp, H4), jnp.float32)    # h0_{t-1} @ whh0^T (h0 init = 0)

    for t in range(T):
        # layer 0: recurrent term r0 was produced by the previous step's
        # shared matmul -> only elementwise work + gates on this part of chain.
        z0 = zx0[t * Bp:(t + 1) * Bp, :] + r0
        i0, f0, g0, o0 = gates(z0)
        c0 = f0 * c0 + i0 * g0
        h0 = o0 * jnp.tanh(c0)

        # shared h0 LHS: one (Bp,H)x(H,8H) matmul gives layer-0's next-step
        # recurrent term and layer-1's input term at step t.
        shared = jnp.dot(h0.astype(mm_dtype), wsh,
                         preferred_element_type=jnp.float32)     # (Bp, 8H)
        r0 = shared[:, :H4]
        in1 = shared[:, H4:]

        # layer 1: its only remaining matmul is off the h0 critical chain.
        r1 = jnp.dot(h1.astype(mm_dtype), whh1,
                     preferred_element_type=jnp.float32)
        z1 = in1 + r1 + b1
        i1, f1, g1, o1 = gates(z1)
        c1 = f1 * c1 + i1 * g1
        h1 = o1 * jnp.tanh(c1)

    # fc on the last-timestep hidden state of the top layer (lane-padded S).
    out_ref[...] = (jnp.dot(h1.astype(mm_dtype), wfc,
                            preferred_element_type=jnp.float32)
                    + bfc)


# -------------------- wrapper --------------------
def lstm_tsp_solver(x, params, matmul_dtype=jnp.bfloat16):
    """x: (B, T, D_in) float32 -> (B, sequence_len) float32.

    Recurrent/fc matmul operands are cast to `matmul_dtype` (bf16: MXU-native
    on v6e/v7x, supported on v5e); accumulation and all gate elementwise math
    stay in f32.  The input projection stays fully in f32 (VPU).  Batch is
    padded to a sublane multiple and the fc output to a lane multiple; padding
    is sliced off outside the kernel.
    """
    B, T, Din = x.shape
    H = params["whh0"].shape[1]
    S = params["wfc"].shape[0]

    SUB, LANE = 8, 128
    Bp = ((B + SUB - 1) // SUB) * SUB            # padded batch (>= 8)
    Sp = ((S + LANE - 1) // LANE) * LANE         # lane-dense fc output width

    # (B,T,Din) -> (T,Bp,Din) -> flat (T*Bp, Din), f32 (no coord quantization).
    x_tm = jnp.transpose(x, (1, 0, 2)).astype(jnp.float32)
    x_tm = jnp.pad(x_tm, ((0, 0), (0, Bp - B), (0, 0)))
    x_flat = x_tm.reshape(T * Bp, Din)

    wih0_t = params["wih0"].T.astype(jnp.float32)                      # (Din,4H)
    b0 = (params["bih0"] + params["bhh0"]).reshape(1, 4 * H).astype(jnp.float32)

    # fused shared-LHS recurrent weight: [whh0^T | wih1^T]  (H, 8H)
    w_shared = jnp.concatenate([params["whh0"].T, params["wih1"].T],
                               axis=1).astype(matmul_dtype)
    whh1_t = params["whh1"].T.astype(matmul_dtype)                     # (H,4H)
    b1 = (params["bih1"] + params["bhh1"]).reshape(1, 4 * H).astype(jnp.float32)

    wfc_t = jnp.pad(params["wfc"].T, ((0, 0), (0, Sp - S))).astype(matmul_dtype)
    bfc = jnp.pad(params["bfc"], (0, Sp - S)).reshape(1, Sp).astype(jnp.float32)

    args = (x_flat, wih0_t, b0, w_shared, whh1_t, b1, wfc_t, bfc)

    def full_spec(a):
        n = a.ndim
        return pl.BlockSpec(a.shape, lambda *_: (0,) * n)

    out_padded = pl.pallas_call(
        _lstm_tsp_kernel,
        out_shape=jax.ShapeDtypeStruct((Bp, Sp), jnp.float32),
        in_specs=[full_spec(a) for a in args],
        out_specs=pl.BlockSpec((Bp, Sp), lambda *_: (0, 0)),
    )(*args)

    return out_padded[:B, :S]


# -------------------- pure-JAX reference (f32) --------------------
def ref_forward(x, p):
    def lstm_layer(xs, wih, whh, bih, bhh):
        H = whh.shape[1]
        B = xs.shape[1]

        def step(carry, x_t):
            h, c = carry
            z = x_t @ wih.T + bih + h @ whh.T + bhh
            i = jax.nn.sigmoid(z[:, :H])
            f = jax.nn.sigmoid(z[:, H:2 * H])
            g = jnp.tanh(z[:, 2 * H:3 * H])
            o = jax.nn.sigmoid(z[:, 3 * H:])
            c = f * c + i * g
            h = o * jnp.tanh(c)
            return (h, c), h

        init = (jnp.zeros((B, H), jnp.float32), jnp.zeros((B, H), jnp.float32))
        _, hs = lax.scan(step, init, xs)
        return hs

    xs = jnp.transpose(x, (1, 0, 2))
    hs0 = lstm_layer(xs, p["wih0"], p["whh0"], p["bih0"], p["bhh0"])
    hs1 = lstm_layer(hs0, p["wih1"], p["whh1"], p["bih1"], p["bhh1"])
    return hs1[-1] @ p["wfc"].T + p["bfc"]


# -------------------- parameter init (deterministic) --------------------
def init_params(key, input_dim, hidden_dim, sequence_len):
    ks = jax.random.split(key, 10)
    H = hidden_dim
    k = 1.0 / jnp.sqrt(jnp.float32(H))

    def u(kk, shape, bound):
        return jax.random.uniform(kk, shape, jnp.float32, -bound, bound)

    return {
        "wih0": u(ks[0], (4 * H, input_dim), k),
        "whh0": u(ks[1], (4 * H, H), k),
        "bih0": u(ks[2], (4 * H,), k),
        "bhh0": u(ks[3], (4 * H,), k),
        "wih1": u(ks[4], (4 * H, H), k),
        "whh1": u(ks[5], (4 * H, H), k),
        "bih1": u(ks[6], (4 * H,), k),
        "bhh1": u(ks[7], (4 * H,), k),
        "wfc": u(ks[8], (sequence_len, H), k),
        "bfc": u(ks[9], (sequence_len,), k),
    }


if __name__ == "__main__":
    # Small shapes consistent with the module: x is (batch, num_cities, 2).
    batch, seq_len, input_dim, hidden_dim = 4, 8, 2, 32
    sequence_len = seq_len  # fc maps hidden -> sequence_len (= num_cities)

    key = jax.random.PRNGKey(0)
    kx, kp = jax.random.split(key)
    x = jax.random.normal(kx, (batch, seq_len, input_dim), jnp.float32)
    params = init_params(kp, input_dim, hidden_dim, sequence_len)

    out = lstm_tsp_solver(x, params)
    out = jax.block_until_ready(out)

    ref = jax.block_until_ready(ref_forward(x, params))
    assert out.shape == (batch, sequence_len)
    # bf16 MXU operands vs f32 reference -> modest tolerance.
    assert jnp.allclose(out, ref, atol=3e-2, rtol=3e-2), "mismatch vs reference"

    print("KERNEL_OK")
</pallas_src>

<mosaic_0001>
module attributes {stable_mosaic.version = 11 : i64} {
  func.func @_lstm_tsp_kernel(%arg0: memref<64x2xf32, #tpu.memory_space<vmem>>, %arg1: memref<2x128xf32, #tpu.memory_space<vmem>>, %arg2: memref<1x128xf32, #tpu.memory_space<vmem>>, %arg3: memref<32x256xbf16, #tpu.memory_space<vmem>>, %arg4: memref<32x128xbf16, #tpu.memory_space<vmem>>, %arg5: memref<1x128xf32, #tpu.memory_space<vmem>>, %arg6: memref<32x128xbf16, #tpu.memory_space<vmem>>, %arg7: memref<1x128xf32, #tpu.memory_space<vmem>>, %arg8: memref<8x128xf32, #tpu.memory_space<vmem>>) attributes {dimension_semantics = [], scalar_prefetch = 0 : i64, scratch_operands = 0 : i64, tpu.core_type = #tpu.core_type<tc>} {
    %c0 = arith.constant 0 : index
    %c0_0 = arith.constant 0 : index
    %0 = vector.load %arg0[%c0, %c0_0] : memref<64x2xf32, #tpu.memory_space<vmem>>, vector<64x2xf32>
    %c0_1 = arith.constant 0 : index
    %c0_2 = arith.constant 0 : index
    %1 = vector.load %arg1[%c0_1, %c0_2] : memref<2x128xf32, #tpu.memory_space<vmem>>, vector<2x128xf32>
    %c0_3 = arith.constant 0 : index
    %c0_4 = arith.constant 0 : index
    %2 = vector.load %arg3[%c0_3, %c0_4] : memref<32x256xbf16, #tpu.memory_space<vmem>>, vector<32x256xbf16>
    %c0_5 = arith.constant 0 : index
    %c0_6 = arith.constant 0 : index
    %3 = vector.load %arg4[%c0_5, %c0_6] : memref<32x128xbf16, #tpu.memory_space<vmem>>, vector<32x128xbf16>
    %c0_7 = arith.constant 0 : index
    %c0_8 = arith.constant 0 : index
    %4 = vector.load %arg6[%c0_7, %c0_8] : memref<32x128xbf16, #tpu.memory_space<vmem>>, vector<32x128xbf16>
    %c0_9 = arith.constant 0 : index
    %c0_10 = arith.constant 0 : index
    %5 = vector.load %arg7[%c0_9, %c0_10] : memref<1x128xf32, #tpu.memory_space<vmem>>, vector<1x128xf32>
    %c0_11 = arith.constant 0 : index
    %c0_12 = arith.constant 0 : index
    %6 = vector.load %arg5[%c0_11, %c0_12] : memref<1x128xf32, #tpu.memory_space<vmem>>, vector<1x128xf32>
    %7 = vector.shape_cast %6 : vector<1x128xf32> to vector<1x128xf32>
    %8 = vector.broadcast %7 : vector<1x128xf32> to vector<8x128xf32>
    %c0_13 = arith.constant 0 : index
    %c0_14 = arith.constant 0 : index
    %9 = vector.load %arg2[%c0_13, %c0_14] : memref<1x128xf32, #tpu.memory_space<vmem>>, vector<1x128xf32>
    %10 = vector.shape_cast %9 : vector<1x128xf32> to vector<1x128xf32>
    %11 = vector.broadcast %10 : vector<1x128xf32> to vector<64x128xf32>
    %12 = vector.extract_strided_slice %0 {offsets = [0, 0], sizes = [64, 1], strides = [1, 1]} : vector<64x2xf32> to vector<64x1xf32>
    %13 = vector.extract_strided_slice %1 {offsets = [0, 0], sizes = [1, 128], strides = [1, 1]} : vector<2x128xf32> to vector<1x128xf32>
    %14 = vector.broadcast %12 : vector<64x1xf32> to vector<64x128xf32>
    %15 = vector.broadcast %13 : vector<1x128xf32> to vector<64x128xf32>
    %16 = arith.mulf %14, %15 : vector<64x128xf32>
    %17 = arith.addf %11, %16 : vector<64x128xf32>
    %18 = vector.extract_strided_slice %0 {offsets = [0, 1], sizes = [64, 1], strides = [1, 1]} : vector<64x2xf32> to vector<64x1xf32>
    %19 = vector.extract_strided_slice %1 {offsets = [1, 0], sizes = [1, 128], strides = [1, 1]} : vector<2x128xf32> to vector<1x128xf32>
    %20 = vector.broadcast %18 : vector<64x1xf32> to vector<64x128xf32>
    %21 = vector.broadcast %19 : vector<1x128xf32> to vector<64x128xf32>
    %22 = arith.mulf %20, %21 : vector<64x128xf32>
    %23 = arith.addf %17, %22 : vector<64x128xf32>
    %cst = arith.constant 0.000000e+00 : f32
    %24 = vector.broadcast %cst : f32 to vector<8x32xf32>
    %cst_15 = arith.constant 0.000000e+00 : f32
    %25 = vector.broadcast %cst_15 : f32 to vector<8x32xf32>
    %cst_16 = arith.constant 0.000000e+00 : f32
    %26 = vector.broadcast %cst_16 : f32 to vector<8x32xf32>
    %cst_17 = arith.constant 0.000000e+00 : f32
    %27 = vector.broadcast %cst_17 : f32 to vector<8x128xf32>
    %28 = vector.extract_strided_slice %23 {offsets = [0, 0], sizes = [8, 128], strides = [1, 1]} : vector<64x128xf32> to vector<8x128xf32>
    %29 = arith.addf %28, %27 : vector<8x128xf32>
    %30 = arith.negf %29 : vector<8x128xf32>
    %31 = math.exp %30 : vector<8x128xf32>
    %cst_18 = arith.constant 1.000000e+00 : f32
    %32 = vector.broadcast %cst_18 : f32 to vector<8x128xf32>
    %33 = arith.addf %32, %31 : vector<8x128xf32>
    %34 = arith.divf %32, %33 : vector<8x128xf32>
    %35 = math.tanh %29 : vector<8x128xf32>
    %36 = vector.extract_strided_slice %34 {offsets = [0, 0], sizes = [8, 32], strides = [1, 1]} : vector<8x128xf32> to vector<8x32xf32>
    %37 = vector.extract_strided_slice %34 {offsets = [0, 32], sizes = [8, 32], strides = [1, 1]} : vector<8x128xf32> to vector<8x32xf32>
    %38 = vector.extract_strided_slice %35 {offsets = [0, 64], sizes = [8, 32], strides = [1, 1]} : vector<8x128xf32> to vector<8x32xf32>
    %39 = vector.extract_strided_slice %34 {offsets = [0, 96], sizes = [8, 32], strides = [1, 1]} : vector<8x128xf32> to vector<8x32xf32>
    %40 = arith.mulf %37, %24 : vector<8x32xf32>
    %41 = arith.mulf %36, %38 : vector<8x32xf32>
    %42 = arith.addf %40, %41 : vector<8x32xf32>
    %43 = math.tanh %42 : vector<8x32xf32>
    %44 = arith.mulf %39, %43 : vector<8x32xf32>
    %45 = arith.truncf %44 : vector<8x32xf32> to vector<8x32xbf16>
    %cst_19 = arith.constant dense<0.000000e+00> : vector<8x256xf32>
    %46 = tpu.matmul %45, %2, %cst_19 {dimension_numbers = #tpu.dot_dimension_numbers<[1], [0], [0], [1], [0, 0, 1, 1], [], []>} : vector<8x32xbf16>, vector<32x256xbf16>, vector<8x256xf32> -> vector<8x256xf32>
    %47 = vector.extract_strided_slice %46 {offsets = [0, 0], sizes = [8, 128], strides = [1, 1]} : vector<8x256xf32> to vector<8x128xf32>
    %48 = vector.extract_strided_slice %46 {offsets = [0, 128], sizes = [8, 128], strides = [1, 1]} : vector<8x256xf32> to vector<8x128xf32>
    %49 = arith.truncf %25 : vector<8x32xf32> to vector<8x32xbf16>
    %cst_20 = arith.constant dense<0.000000e+00> : vector<8x128xf32>
    %50 = tpu.matmul %49, %3, %cst_20 {dimension_numbers = #tpu.dot_dimension_numbers<[1], [0], [0], [1], [0, 0, 1, 1], [], []>} : vector<8x32xbf16>, vector<32x128xbf16>, vector<8x128xf32> -> vector<8x128xf32>
    %51 = arith.addf %48, %50 : vector<8x128xf32>
    %52 = arith.addf %51, %8 : vector<8x128xf32>
    %53 = arith.negf %52 : vector<8x128xf32>
    %54 = math.exp %53 : vector<8x128xf32>
    %cst_21 = arith.constant 1.000000e+00 : f32
    %55 = vector.broadcast %cst_21 : f32 to vector<8x128xf32>
    %56 = arith.addf %55, %54 : vector<8x128xf32>
    %57 = arith.divf %55, %56 : vector<8x128xf32>
    %58 = math.tanh %52 : vector<8x128xf32>
    %59 = vector.extract_strided_slice %57 {offsets = [0, 0], sizes = [8, 32], strides = [1, 1]} : vector<8x128xf32> to vector<8x32xf32>
    %60 = vector.extract_strided_slice %57 {offsets = [0, 32], sizes = [8, 32], strides = [1, 1]} : vector<8x128xf32> to vector<8x32xf32>
    %61 = vector.extract_strided_slice %58 {offsets = [0, 64], sizes = [8, 32], strides = [1, 1]} : vector<8x128xf32> to vector<8x32xf32>
    %62 = vector.extract_strided_slice %57 {offsets = [0, 96], sizes = [8, 32], strides = [1, 1]} : vector<8x128xf32> to vector<8x32xf32>
    %63 = arith.mulf %60, %26 : vector<8x32xf32>
    %64 = arith.mulf %59, %61 : vector<8x32xf32>
    %65 = arith.addf %63, %64 : vector<8x32xf32>
    %66 = math.tanh %65 : vector<8x32xf32>
    %67 = arith.mulf %62, %66 : vector<8x32xf32>
    %68 = vector.extract_strided_slice %23 {offsets = [8, 0], sizes = [8, 128], strides = [1, 1]} : vector<64x128xf32> to vector<8x128xf32>
    %69 = arith.addf %68, %47 : vector<8x128xf32>
    %70 = arith.negf %69 : vector<8x128xf32>
    %71 = math.exp %70 : vector<8x128xf32>
    %cst_22 = arith.constant 1.000000e+00 : f32
    %72 = vector.broadcast %cst_22 : f32 to vector<8x128xf32>
    %73 = arith.addf %72, %71 : vector<8x128xf32>
    %74 = arith.divf %72, %73 : vector<8x128xf32>
    %75 = math.tanh %69 : vector<8x128xf32>
    %76 = vector.extract_strided_slice %74 {offsets = [0, 0], sizes = [8, 32], strides = [1, 1]} : vector<8x128xf32> to vector<8x32xf32>
    %77 = vector.extract_strided_slice %74 {offsets = [0, 32], sizes = [8, 32], strides = [1, 1]} : vector<8x128xf32> to vector<8x32xf32>
    %78 = vector.extract_strided_slice %75 {offsets = [0, 64], sizes = [8, 32], strides = [1, 1]} : vector<8x128xf32> to vector<8x32xf32>
    %79 = vector.extract_strided_slice %74 {offsets = [0, 96], sizes = [8, 32], strides = [1, 1]} : vector<8x128xf32> to vector<8x32xf32>
    %80 = arith.mulf %77, %42 : vector<8x32xf32>
    %81 = arith.mulf %76, %78 : vector<8x32xf32>
    %82 = arith.addf %80, %81 : vector<8x32xf32>
    %83 = math.tanh %82 : vector<8x32xf32>
    %84 = arith.mulf %79, %83 : vector<8x32xf32>
    %85 = arith.truncf %84 : vector<8x32xf32> to vector<8x32xbf16>
    %cst_23 = arith.constant dense<0.000000e+00> : vector<8x256xf32>
    %86 = tpu.matmul %85, %2, %cst_23 {dimension_numbers = #tpu.dot_dimension_numbers<[1], [0], [0], [1], [0, 0, 1, 1], [], []>} : vector<8x32xbf16>, vector<32x256xbf16>, vector<8x256xf32> -> vector<8x256xf32>
    %87 = vector.extract_strided_slice %86 {offsets = [0, 0], sizes = [8, 128], strides = [1, 1]} : vector<8x256xf32> to vector<8x128xf32>
    %88 = vector.extract_strided_slice %86 {offsets = [0, 128], sizes = [8, 128], strides = [1, 1]} : vector<8x256xf32> to vector<8x128xf32>
    %89 = arith.truncf %67 : vector<8x32xf32> to vector<8x32xbf16>
    %cst_24 = arith.constant dense<0.000000e+00> : vector<8x128xf32>
    %90 = tpu.matmul %89, %3, %cst_24 {dimension_numbers = #tpu.dot_dimension_numbers<[1], [0], [0], [1], [0, 0, 1, 1], [], []>} : vector<8x32xbf16>, vector<32x128xbf16>, vector<8x128xf32> -> vector<8x128xf32>
    %91 = arith.addf %88, %90 : vector<8x128xf32>
    %92 = arith.addf %91, %8 : vector<8x128xf32>
    %93 = arith.negf %92 : vector<8x128xf32>
    %94 = math.exp %93 : vector<8x128xf32>
    %cst_25 = arith.constant 1.000000e+00 : f32
    %95 = vector.broadcast %cst_25 : f32 to vector<8x128xf32>
    %96 = arith.addf %95, %94 : vector<8x128xf32>
    %97 = arith.divf %95, %96 : vector<8x128xf32>
    %98 = math.tanh %92 : vector<8x128xf32>
    %99 = vector.extract_strided_slice %97 {offsets = [0, 0], sizes = [8, 32], strides = [1, 1]} : vector<8x128xf32> to vector<8x32xf32>
    %100 = vector.extract_strided_slice %97 {offsets = [0, 32], sizes = [8, 32], strides = [1, 1]} : vector<8x128xf32> to vector<8x32xf32>
    %101 = vector.extract_strided_slice %98 {offsets = [0, 64], sizes = [8, 32], strides = [1, 1]} : vector<8x128xf32> to vector<8x32xf32>
    %102 = vector.extract_strided_slice %97 {offsets = [0, 96], sizes = [8, 32], strides = [1, 1]} : vector<8x128xf32> to vector<8x32xf32>
    %103 = arith.mulf %100, %65 : vector<8x32xf32>
    %104 = arith.mulf %99, %101 : vector<8x32xf32>
    %105 = arith.addf %103, %104 : vector<8x32xf32>
    %106 = math.tanh %105 : vector<8x32xf32>
    %107 = arith.mulf %102, %106 : vector<8x32xf32>
    %108 = vector.extract_strided_slice %23 {offsets = [16, 0], sizes = [8, 128], strides = [1, 1]} : vector<64x128xf32> to vector<8x128xf32>
    %109 = arith.addf %108, %87 : vector<8x128xf32>
    %110 = arith.negf %109 : vector<8x128xf32>
    %111 = math.exp %110 : vector<8x128xf32>
    %cst_26 = arith.constant 1.000000e+00 : f32
    %112 = vector.broadcast %cst_26 : f32 to vector<8x128xf32>
    %113 = arith.addf %112, %111 : vector<8x128xf32>
    %114 = arith.divf %112, %113 : vector<8x128xf32>
    %115 = math.tanh %109 : vector<8x128xf32>
    %116 = vector.extract_strided_slice %114 {offsets = [0, 0], sizes = [8, 32], strides = [1, 1]} : vector<8x128xf32> to vector<8x32xf32>
    %117 = vector.extract_strided_slice %114 {offsets = [0, 32], sizes = [8, 32], strides = [1, 1]} : vector<8x128xf32> to vector<8x32xf32>
    %118 = vector.extract_strided_slice %115 {offsets = [0, 64], sizes = [8, 32], strides = [1, 1]} : vector<8x128xf32> to vector<8x32xf32>
    %119 = vector.extract_strided_slice %114 {offsets = [0, 96], sizes = [8, 32], strides = [1, 1]} : vector<8x128xf32> to vector<8x32xf32>
    %120 = arith.mulf %117, %82 : vector<8x32xf32>
    %121 = arith.mulf %116, %118 : vector<8x32xf32>
    %122 = arith.addf %120, %121 : vector<8x32xf32>
    %123 = math.tanh %122 : vector<8x32xf32>
    %124 = arith.mulf %119, %123 : vector<8x32xf32>
    %125 = arith.truncf %124 : vector<8x32xf32> to vector<8x32xbf16>
    %cst_27 = arith.constant dense<0.000000e+00> : vector<8x256xf32>
    %126 = tpu.matmul %125, %2, %cst_27 {dimension_numbers = #tpu.dot_dimension_numbers<[1], [0], [0], [1], [0, 0, 1, 1], [], []>} : vector<8x32xbf16>, vector<32x256xbf16>, vector<8x256xf32> -> vector<8x256xf32>
    %127 = vector.extract_strided_slice %126 {offsets = [0, 0], sizes = [8, 128], strides = [1, 1]} : vector<8x256xf32> to vector<8x128xf32>
    %128 = vector.extract_strided_slice %126 {offsets = [0, 128], sizes = [8, 128], strides = [1, 1]} : vector<8x256xf32> to vector<8x128xf32>
    %129 = arith.truncf %107 : vector<8x32xf32> to vector<8x32xbf16>
    %cst_28 = arith.constant dense<0.000000e+00> : vector<8x128xf32>
    %130 = tpu.matmul %129, %3, %cst_28 {dimension_numbers = #tpu.dot_dimension_numbers<[1], [0], [0], [1], [0, 0, 1, 1], [], []>} : vector<8x32xbf16>, vector<32x128xbf16>, vector<8x128xf32> -> vector<8x128xf32>
    %131 = arith.addf %128, %130 : vector<8x128xf32>
    %132 = arith.addf %131, %8 : vector<8x128xf32>
    %133 = arith.negf %132 : vector<8x128xf32>
    %134 = math.exp %133 : vector<8x128xf32>
    %cst_29 = arith.constant 1.000000e+00 : f32
    %135 = vector.broadcast %cst_29 : f32 to vector<8x128xf32>
    %136 = arith.addf %135, %134 : vector<8x128xf32>
    %137 = arith.divf %135, %136 : vector<8x128xf32>
    %138 = math.tanh %132 : vector<8x128xf32>
    %139 = vector.extract_strided_slice %137 {offsets = [0, 0], sizes = [8, 32], strides = [1, 1]} : vector<8x128xf32> to vector<8x32xf32>
    %140 = vector.extract_strided_slice %137 {offsets = [0, 32], sizes = [8, 32], strides = [1, 1]} : vector<8x128xf32> to vector<8x32xf32>
    %141 = vector.extract_strided_slice %138 {offsets = [0, 64], sizes = [8, 32], strides = [1, 1]} : vector<8x128xf32> to vector<8x32xf32>
    %142 = vector.extract_strided_slice %137 {offsets = [0, 96], sizes = [8, 32], strides = [1, 1]} : vector<8x128xf32> to vector<8x32xf32>
    %143 = arith.mulf %140, %105 : vector<8x32xf32>
    %144 = arith.mulf %139, %141 : vector<8x32xf32>
    %145 = arith.addf %143, %144 : vector<8x32xf32>
    %146 = math.tanh %145 : vector<8x32xf32>
    %147 = arith.mulf %142, %146 : vector<8x32xf32>
    %148 = vector.extract_strided_slice %23 {offsets = [24, 0], sizes = [8, 128], strides = [1, 1]} : vector<64x128xf32> to vector<8x128xf32>
    %149 = arith.addf %148, %127 : vector<8x128xf32>
    %150 = arith.negf %149 : vector<8x128xf32>
    %151 = math.exp %150 : vector<8x128xf32>
    %cst_30 = arith.constant 1.000000e+00 : f32
    %152 = vector.broadcast %cst_30 : f32 to vector<8x128xf32>
    %153 = arith.addf %152, %151 : vector<8x128xf32>
    %154 = arith.divf %152, %153 : vector<8x128xf32>
    %155 = math.tanh %149 : vector<8x128xf32>
    %156 = vector.extract_strided_slice %154 {offsets = [0, 0], sizes = [8, 32], strides = [1, 1]} : vector<8x128xf32> to vector<8x32xf32>
    %157 = vector.extract_strided_slice %154 {offsets = [0, 32], sizes = [8, 32], strides = [1, 1]} : vector<8x128xf32> to vector<8x32xf32>
    %158 = vector.extract_strided_slice %155 {offsets = [0, 64], sizes = [8, 32], strides = [1, 1]} : vector<8x128xf32> to vector<8x32xf32>
    %159 = vector.extract_strided_slice %154 {offsets = [0, 96], sizes = [8, 32], strides = [1, 1]} : vector<8x128xf32> to vector<8x32xf32>
    %160 = arith.mulf %157, %122 : vector<8x32xf32>
    %161 = arith.mulf %156, %158 : vector<8x32xf32>
    %162 = arith.addf %160, %161 : vector<8x32xf32>
    %163 = math.tanh %162 : vector<8x32xf32>
    %164 = arith.mulf %159, %163 : vector<8x32xf32>
    %165 = arith.truncf %164 : vector<8x32xf32> to vector<8x32xbf16>
    %cst_31 = arith.constant dense<0.000000e+00> : vector<8x256xf32>
    %166 = tpu.matmul %165, %2, %cst_31 {dimension_numbers = #tpu.dot_dimension_numbers<[1], [0], [0], [1], [0, 0, 1, 1], [], []>} : vector<8x32xbf16>, vector<32x256xbf16>, vector<8x256xf32> -> vector<8x256xf32>
    %167 = vector.extract_strided_slice %166 {offsets = [0, 0], sizes = [8, 128], strides = [1, 1]} : vector<8x256xf32> to vector<8x128xf32>
    %168 = vector.extract_strided_slice %166 {offsets = [0, 128], sizes = [8, 128], strides = [1, 1]} : vector<8x256xf32> to vector<8x128xf32>
    %169 = arith.truncf %147 : vector<8x32xf32> to vector<8x32xbf16>
    %cst_32 = arith.constant dense<0.000000e+00> : vector<8x128xf32>
    %170 = tpu.matmul %169, %3, %cst_32 {dimension_numbers = #tpu.dot_dimension_numbers<[1], [0], [0], [1], [0, 0, 1, 1], [], []>} : vector<8x32xbf16>, vector<32x128xbf16>, vector<8x128xf32> -> vector<8x128xf32>
    %171 = arith.addf %168, %170 : vector<8x128xf32>
    %172 = arith.addf %171, %8 : vector<8x128xf32>
    %173 = arith.negf %172 : vector<8x128xf32>
    %174 = math.exp %173 : vector<8x128xf32>
    %cst_33 = arith.constant 1.000000e+00 : f32
    %175 = vector.broadcast %cst_33 : f32 to vector<8x128xf32>
    %176 = arith.addf %175, %174 : vector<8x128xf32>
    %177 = arith.divf %175, %176 : vector<8x128xf32>
    %178 = math.tanh %172 : vector<8x128xf32>
    %179 = vector.extract_strided_slice %177 {offsets = [0, 0], sizes = [8, 32], strides = [1, 1]} : vector<8x128xf32> to vector<8x32xf32>
    %180 = vector.extract_strided_slice %177 {offsets = [0, 32], sizes = [8, 32], strides = [1, 1]} : vector<8x128xf32> to vector<8x32xf32>
    %181 = vector.extract_strided_slice %178 {offsets = [0, 64], sizes = [8, 32], strides = [1, 1]} : vector<8x128xf32> to vector<8x32xf32>
    %182 = vector.extract_strided_slice %177 {offsets = [0, 96], sizes = [8, 32], strides = [1, 1]} : vector<8x128xf32> to vector<8x32xf32>
    %183 = arith.mulf %180, %145 : vector<8x32xf32>
    %184 = arith.mulf %179, %181 : vector<8x32xf32>
    %185 = arith.addf %183, %184 : vector<8x32xf32>
    %186 = math.tanh %185 : vector<8x32xf32>
    %187 = arith.mulf %182, %186 : vector<8x32xf32>
    %188 = vector.extract_strided_slice %23 {offsets = [32, 0], sizes = [8, 128], strides = [1, 1]} : vector<64x128xf32> to vector<8x128xf32>
    %189 = arith.addf %188, %167 : vector<8x128xf32>
    %190 = arith.negf %189 : vector<8x128xf32>
    %191 = math.exp %190 : vector<8x128xf32>
    %cst_34 = arith.constant 1.000000e+00 : f32
    %192 = vector.broadcast %cst_34 : f32 to vector<8x128xf32>
    %193 = arith.addf %192, %191 : vector<8x128xf32>
    %194 = arith.divf %192, %193 : vector<8x128xf32>
    %195 = math.tanh %189 : vector<8x128xf32>
    %196 = vector.extract_strided_slice %194 {offsets = [0, 0], sizes = [8, 32], strides = [1, 1]} : vector<8x128xf32> to vector<8x32xf32>
    %197 = vector.extract_strided_slice %194 {offsets = [0, 32], sizes = [8, 32], strides = [1, 1]} : vector<8x128xf32> to vector<8x32xf32>
    %198 = vector.extract_strided_slice %195 {offsets = [0, 64], sizes = [8, 32], strides = [1, 1]} : vector<8x128xf32> to vector<8x32xf32>
    %199 = vector.extract_strided_slice %194 {offsets = [0, 96], sizes = [8, 32], strides = [1, 1]} : vector<8x128xf32> to vector<8x32xf32>
    %200 = arith.mulf %197, %162 : vector<8x32xf32>
    %201 = arith.mulf %196, %198 : vector<8x32xf32>
    %202 = arith.addf %200, %201 : vector<8x32xf32>
    %203 = math.tanh %202 : vector<8x32xf32>
    %204 = arith.mulf %199, %203 : vector<8x32xf32>
    %205 = arith.truncf %204 : vector<8x32xf32> to vector<8x32xbf16>
    %cst_35 = arith.constant dense<0.000000e+00> : vector<8x256xf32>
    %206 = tpu.matmul %205, %2, %cst_35 {dimension_numbers = #tpu.dot_dimension_numbers<[1], [0], [0], [1], [0, 0, 1, 1], [], []>} : vector<8x32xbf16>, vector<32x256xbf16>, vector<8x256xf32> -> vector<8x256xf32>
    %207 = vector.extract_strided_slice %206 {offsets = [0, 0], sizes = [8, 128], strides = [1, 1]} : vector<8x256xf32> to vector<8x128xf32>
    %208 = vector.extract_strided_slice %206 {offsets = [0, 128], sizes = [8, 128], strides = [1, 1]} : vector<8x256xf32> to vector<8x128xf32>
    %209 = arith.truncf %187 : vector<8x32xf32> to vector<8x32xbf16>
    %cst_36 = arith.constant dense<0.000000e+00> : vector<8x128xf32>
    %210 = tpu.matmul %209, %3, %cst_36 {dimension_numbers = #tpu.dot_dimension_numbers<[1], [0], [0], [1], [0, 0, 1, 1], [], []>} : vector<8x32xbf16>, vector<32x128xbf16>, vector<8x128xf32> -> vector<8x128xf32>
    %211 = arith.addf %208, %210 : vector<8x128xf32>
    %212 = arith.addf %211, %8 : vector<8x128xf32>
    %213 = arith.negf %212 : vector<8x128xf32>
    %214 = math.exp %213 : vector<8x128xf32>
    %cst_37 = arith.constant 1.000000e+00 : f32
    %215 = vector.broadcast %cst_37 : f32 to vector<8x128xf32>
    %216 = arith.addf %215, %214 : vector<8x128xf32>
    %217 = arith.divf %215, %216 : vector<8x128xf32>
    %218 = math.tanh %212 : vector<8x128xf32>
    %219 = vector.extract_strided_slice %217 {offsets = [0, 0], sizes = [8, 32], strides = [1, 1]} : vector<8x128xf32> to vector<8x32xf32>
    %220 = vector.extract_strided_slice %217 {offsets = [0, 32], sizes = [8, 32], strides = [1, 1]} : vector<8x128xf32> to vector<8x32xf32>
    %221 = vector.extract_strided_slice %218 {offsets = [0, 64], sizes = [8, 32], strides = [1, 1]} : vector<8x128xf32> to vector<8x32xf32>
    %222 = vector.extract_strided_slice %217 {offsets = [0, 96], sizes = [8, 32], strides = [1, 1]} : vector<8x128xf32> to vector<8x32xf32>
    %223 = arith.mulf %220, %185 : vector<8x32xf32>
    %224 = arith.mulf %219, %221 : vector<8x32xf32>
    %225 = arith.addf %223, %224 : vector<8x32xf32>
    %226 = math.tanh %225 : vector<8x32xf32>
    %227 = arith.mulf %222, %226 : vector<8x32xf32>
    %228 = vector.extract_strided_slice %23 {offsets = [40, 0], sizes = [8, 128], strides = [1, 1]} : vector<64x128xf32> to vector<8x128xf32>
    %229 = arith.addf %228, %207 : vector<8x128xf32>
    %230 = arith.negf %229 : vector<8x128xf32>
    %231 = math.exp %230 : vector<8x128xf32>
    %cst_38 = arith.constant 1.000000e+00 : f32
    %232 = vector.broadcast %cst_38 : f32 to vector<8x128xf32>
    %233 = arith.addf %232, %231 : vector<8x128xf32>
    %234 = arith.divf %232, %233 : vector<8x128xf32>
    %235 = math.tanh %229 : vector<8x128xf32>
    %236 = vector.extract_strided_slice %234 {offsets = [0, 0], sizes = [8, 32], strides = [1, 1]} : vector<8x128xf32> to vector<8x32xf32>
    %237 = vector.extract_strided_slice %234 {offsets = [0, 32], sizes = [8, 32], strides = [1, 1]} : vector<8x128xf32> to vector<8x32xf32>
    %238 = vector.extract_strided_slice %235 {offsets = [0, 64], sizes = [8, 32], strides = [1, 1]} : vector<8x128xf32> to vector<8x32xf32>
    %239 = vector.extract_strided_slice %234 {offsets = [0, 96], sizes = [8, 32], strides = [1, 1]} : vector<8x128xf32> to vector<8x32xf32>
    %240 = arith.mulf %237, %202 : vector<8x32xf32>
    %241 = arith.mulf %236, %238 : vector<8x32xf32>
    %242 = arith.addf %240, %241 : vector<8x32xf32>
    %243 = math.tanh %242 : vector<8x32xf32>
    %244 = arith.mulf %239, %243 : vector<8x32xf32>
    %245 = arith.truncf %244 : vector<8x32xf32> to vector<8x32xbf16>
    %cst_39 = arith.constant dense<0.000000e+00> : vector<8x256xf32>
    %246 = tpu.matmul %245, %2, %cst_39 {dimension_numbers = #tpu.dot_dimension_numbers<[1], [0], [0], [1], [0, 0, 1, 1], [], []>} : vector<8x32xbf16>, vector<32x256xbf16>, vector<8x256xf32> -> vector<8x256xf32>
    %247 = vector.extract_strided_slice %246 {offsets = [0, 0], sizes = [8, 128], strides = [1, 1]} : vector<8x256xf32> to vector<8x128xf32>
    %248 = vector.extract_strided_slice %246 {offsets = [0, 128], sizes = [8, 128], strides = [1, 1]} : vector<8x256xf32> to vector<8x128xf32>
    %249 = arith.truncf %227 : vector<8x32xf32> to vector<8x32xbf16>
    %cst_40 = arith.constant dense<0.000000e+00> : vector<8x128xf32>
    %250 = tpu.matmul %249, %3, %cst_40 {dimension_numbers = #tpu.dot_dimension_numbers<[1], [0], [0], [1], [0, 0, 1, 1], [], []>} : vector<8x32xbf16>, vector<32x128xbf16>, vector<8x128xf32> -> vector<8x128xf32>
    %251 = arith.addf %248, %250 : vector<8x128xf32>
    %252 = arith.addf %251, %8 : vector<8x128xf32>
    %253 = arith.negf %252 : vector<8x128xf32>
    %254 = math.exp %253 : vector<8x128xf32>
    %cst_41 = arith.constant 1.000000e+00 : f32
    %255 = vector.broadcast %cst_41 : f32 to vector<8x128xf32>
    %256 = arith.addf %255, %254 : vector<8x128xf32>
    %257 = arith.divf %255, %256 : vector<8x128xf32>
    %258 = math.tanh %252 : vector<8x128xf32>
    %259 = vector.extract_strided_slice %257 {offsets = [0, 0], sizes = [8, 32], strides = [1, 1]} : vector<8x128xf32> to vector<8x32xf32>
    %260 = vector.extract_strided_slice %257 {offsets = [0, 32], sizes = [8, 32], strides = [1, 1]} : vector<8x128xf32> to vector<8x32xf32>
    %261 = vector.extract_strided_slice %258 {offsets = [0, 64], sizes = [8, 32], strides = [1, 1]} : vector<8x128xf32> to vector<8x32xf32>
    %262 = vector.extract_strided_slice %257 {offsets = [0, 96], sizes = [8, 32], strides = [1, 1]} : vector<8x128xf32> to vector<8x32xf32>
    %263 = arith.mulf %260, %225 : vector<8x32xf32>
    %264 = arith.mulf %259, %261 : vector<8x32xf32>
    %265 = arith.addf %263, %264 : vector<8x32xf32>
    %266 = math.tanh %265 : vector<8x32xf32>
    %267 = arith.mulf %262, %266 : vector<8x32xf32>
    %268 = vector.extract_strided_slice %23 {offsets = [48, 0], sizes = [8, 128], strides = [1, 1]} : vector<64x128xf32> to vector<8x128xf32>
    %269 = arith.addf %268, %247 : vector<8x128xf32>
    %270 = arith.negf %269 : vector<8x128xf32>
    %271 = math.exp %270 : vector<8x128xf32>
    %cst_42 = arith.constant 1.000000e+00 : f32
    %272 = vector.broadcast %cst_42 : f32 to vector<8x128xf32>
    %273 = arith.addf %272, %271 : vector<8x128xf32>
    %274 = arith.divf %272, %273 : vector<8x128xf32>
    %275 = math.tanh %269 : vector<8x128xf32>
    %276 = vector.extract_strided_slice %274 {offsets = [0, 0], sizes = [8, 32], strides = [1, 1]} : vector<8x128xf32> to vector<8x32xf32>
    %277 = vector.extract_strided_slice %274 {offsets = [0, 32], sizes = [8, 32], strides = [1, 1]} : vector<8x128xf32> to vector<8x32xf32>
    %278 = vector.extract_strided_slice %275 {offsets = [0, 64], sizes = [8, 32], strides = [1, 1]} : vector<8x128xf32> to vector<8x32xf32>
    %279 = vector.extract_strided_slice %274 {offsets = [0, 96], sizes = [8, 32], strides = [1, 1]} : vector<8x128xf32> to vector<8x32xf32>
    %280 = arith.mulf %277, %242 : vector<8x32xf32>
    %281 = arith.mulf %276, %278 : vector<8x32xf32>
    %282 = arith.addf %280, %281 : vector<8x32xf32>
    %283 = math.tanh %282 : vector<8x32xf32>
    %284 = arith.mulf %279, %283 : vector<8x32xf32>
    %285 = arith.truncf %284 : vector<8x32xf32> to vector<8x32xbf16>
    %cst_43 = arith.constant dense<0.000000e+00> : vector<8x256xf32>
    %286 = tpu.matmul %285, %2, %cst_43 {dimension_numbers = #tpu.dot_dimension_numbers<[1], [0], [0], [1], [0, 0, 1, 1], [], []>} : vector<8x32xbf16>, vector<32x256xbf16>, vector<8x256xf32> -> vector<8x256xf32>
    %287 = vector.extract_strided_slice %286 {offsets = [0, 0], sizes = [8, 128], strides = [1, 1]} : vector<8x256xf32> to vector<8x128xf32>
    %288 = vector.extract_strided_slice %286 {offsets = [0, 128], sizes = [8, 128], strides = [1, 1]} : vector<8x256xf32> to vector<8x128xf32>
    %289 = arith.truncf %267 : vector<8x32xf32> to vector<8x32xbf16>
    %cst_44 = arith.constant dense<0.000000e+00> : vector<8x128xf32>
    %290 = tpu.matmul %289, %3, %cst_44 {dimension_numbers = #tpu.dot_dimension_numbers<[1], [0], [0], [1], [0, 0, 1, 1], [], []>} : vector<8x32xbf16>, vector<32x128xbf16>, vector<8x128xf32> -> vector<8x128xf32>
    %291 = arith.addf %288, %290 : vector<8x128xf32>
    %292 = arith.addf %291, %8 : vector<8x128xf32>
    %293 = arith.negf %292 : vector<8x128xf32>
    %294 = math.exp %293 : vector<8x128xf32>
    %cst_45 = arith.constant 1.000000e+00 : f32
    %295 = vector.broadcast %cst_45 : f32 to vector<8x128xf32>
    %296 = arith.addf %295, %294 : vector<8x128xf32>
    %297 = arith.divf %295, %296 : vector<8x128xf32>
    %298 = math.tanh %292 : vector<8x128xf32>
    %299 = vector.extract_strided_slice %297 {offsets = [0, 0], sizes = [8, 32], strides = [1, 1]} : vector<8x128xf32> to vector<8x32xf32>
    %300 = vector.extract_strided_slice %297 {offsets = [0, 32], sizes = [8, 32], strides = [1, 1]} : vector<8x128xf32> to vector<8x32xf32>
    %301 = vector.extract_strided_slice %298 {offsets = [0, 64], sizes = [8, 32], strides = [1, 1]} : vector<8x128xf32> to vector<8x32xf32>
    %302 = vector.extract_strided_slice %297 {offsets = [0, 96], sizes = [8, 32], strides = [1, 1]} : vector<8x128xf32> to vector<8x32xf32>
    %303 = arith.mulf %300, %265 : vector<8x32xf32>
    %304 = arith.mulf %299, %301 : vector<8x32xf32>
    %305 = arith.addf %303, %304 : vector<8x32xf32>
    %306 = math.tanh %305 : vector<8x32xf32>
    %307 = arith.mulf %302, %306 : vector<8x32xf32>
    %308 = vector.extract_strided_slice %23 {offsets = [56, 0], sizes = [8, 128], strides = [1, 1]} : vector<64x128xf32> to vector<8x128xf32>
    %309 = arith.addf %308, %287 : vector<8x128xf32>
    %310 = arith.negf %309 : vector<8x128xf32>
    %311 = math.exp %310 : vector<8x128xf32>
    %cst_46 = arith.constant 1.000000e+00 : f32
    %312 = vector.broadcast %cst_46 : f32 to vector<8x128xf32>
    %313 = arith.addf %312, %311 : vector<8x128xf32>
    %314 = arith.divf %312, %313 : vector<8x128xf32>
    %315 = math.tanh %309 : vector<8x128xf32>
    %316 = vector.extract_strided_slice %314 {offsets = [0, 0], sizes = [8, 32], strides = [1, 1]} : vector<8x128xf32> to vector<8x32xf32>
    %317 = vector.extract_strided_slice %314 {offsets = [0, 32], sizes = [8, 32], strides = [1, 1]} : vector<8x128xf32> to vector<8x32xf32>
    %318 = vector.extract_strided_slice %315 {offsets = [0, 64], sizes = [8, 32], strides = [1, 1]} : vector<8x128xf32> to vector<8x32xf32>
    %319 = vector.extract_strided_slice %314 {offsets = [0, 96], sizes = [8, 32], strides = [1, 1]} : vector<8x128xf32> to vector<8x32xf32>
    %320 = arith.mulf %317, %282 : vector<8x32xf32>
    %321 = arith.mulf %316, %318 : vector<8x32xf32>
    %322 = arith.addf %320, %321 : vector<8x32xf32>
    %323 = math.tanh %322 : vector<8x32xf32>
    %324 = arith.mulf %319, %323 : vector<8x32xf32>
    %325 = arith.truncf %324 : vector<8x32xf32> to vector<8x32xbf16>
    %cst_47 = arith.constant dense<0.000000e+00> : vector<8x256xf32>
    %326 = tpu.matmul %325, %2, %cst_47 {dimension_numbers = #tpu.dot_dimension_numbers<[1], [0], [0], [1], [0, 0, 1, 1], [], []>} : vector<8x32xbf16>, vector<32x256xbf16>, vector<8x256xf32> -> vector<8x256xf32>
    %327 = vector.extract_strided_slice %326 {offsets = [0, 128], sizes = [8, 128], strides = [1, 1]} : vector<8x256xf32> to vector<8x128xf32>
    %328 = arith.truncf %307 : vector<8x32xf32> to vector<8x32xbf16>
    %cst_48 = arith.constant dense<0.000000e+00> : vector<8x128xf32>
    %329 = tpu.matmul %328, %3, %cst_48 {dimension_numbers = #tpu.dot_dimension_numbers<[1], [0], [0], [1], [0, 0, 1, 1], [], []>} : vector<8x32xbf16>, vector<32x128xbf16>, vector<8x128xf32> -> vector<8x128xf32>
    %330 = arith.addf %327, %329 : vector<8x128xf32>
    %331 = arith.addf %330, %8 : vector<8x128xf32>
    %332 = arith.negf %331 : vector<8x128xf32>
    %333 = math.exp %332 : vector<8x128xf32>
    %cst_49 = arith.constant 1.000000e+00 : f32
    %334 = vector.broadcast %cst_49 : f32 to vector<8x128xf32>
    %335 = arith.addf %334, %333 : vector<8x128xf32>
    %336 = arith.divf %334, %335 : vector<8x128xf32>
    %337 = math.tanh %331 : vector<8x128xf32>
    %338 = vector.extract_strided_slice %336 {offsets = [0, 0], sizes = [8, 32], strides = [1, 1]} : vector<8x128xf32> to vector<8x32xf32>
    %339 = vector.extract_strided_slice %336 {offsets = [0, 32], sizes = [8, 32], strides = [1, 1]} : vector<8x128xf32> to vector<8x32xf32>
    %340 = vector.extract_strided_slice %337 {offsets = [0, 64], sizes = [8, 32], strides = [1, 1]} : vector<8x128xf32> to vector<8x32xf32>
    %341 = vector.extract_strided_slice %336 {offsets = [0, 96], sizes = [8, 32], strides = [1, 1]} : vector<8x128xf32> to vector<8x32xf32>
    %342 = arith.mulf %339, %305 : vector<8x32xf32>
    %343 = arith.mulf %338, %340 : vector<8x32xf32>
    %344 = arith.addf %342, %343 : vector<8x32xf32>
    %345 = math.tanh %344 : vector<8x32xf32>
    %346 = arith.mulf %341, %345 : vector<8x32xf32>
    %347 = arith.truncf %346 : vector<8x32xf32> to vector<8x32xbf16>
    %cst_50 = arith.constant dense<0.000000e+00> : vector<8x128xf32>
    %348 = tpu.matmul %347, %4, %cst_50 {dimension_numbers = #tpu.dot_dimension_numbers<[1], [0], [0], [1], [0, 0, 1, 1], [], []>} : vector<8x32xbf16>, vector<32x128xbf16>, vector<8x128xf32> -> vector<8x128xf32>
    %349 = vector.broadcast %5 : vector<1x128xf32> to vector<8x128xf32>
    %350 = arith.addf %348, %349 : vector<8x128xf32>
    %c0_51 = arith.constant 0 : index
    %c0_52 = arith.constant 0 : index
    %351 = vector.load %arg8[%c0_51, %c0_52] : memref<8x128xf32, #tpu.memory_space<vmem>>, vector<8x128xf32>
    tpu.vector_store %arg8[%c0_51, %c0_52], %350 {strides = array<i32>} : memref<8x128xf32, #tpu.memory_space<vmem>>, vector<8x128xf32>,
    return
  }
}

</mosaic_0001>

<llo_original>
// kernel: tpu_custom_call.1
$region0: #{tpu_custom_call.1}
  #allocation0 [shape = 'u32[]', space=smem, size = 0x4, offset = 0x4, fixed_abs, tag = 'smem constant byte address 0x4 - core index']
  #allocation1 [shape = 'u32[144,128]{1,0:T(1,128)}', space=vmem, size = 0x12000, scoped, tag = 'internal scratch']
  %s0 = inlined_call_operand.vmem [shape: f32[64,2], index: 0, kind: input, shape index: {}]
  %s1 = inlined_call_operand.vmem [shape: f32[2,128], index: 1, kind: input, shape index: {}]
  %s2 = inlined_call_operand.vmem [shape: f32[1,128], index: 2, kind: input, shape index: {}]
  %s3 = inlined_call_operand.vmem [shape: bf16[32,256], index: 3, kind: input, shape index: {}]
  %s4 = inlined_call_operand.vmem [shape: bf16[32,128], index: 4, kind: input, shape index: {}]
  %s5 = inlined_call_operand.vmem [shape: f32[1,128], index: 5, kind: input, shape index: {}]
  %s6 = inlined_call_operand.vmem [shape: bf16[32,128], index: 6, kind: input, shape index: {}]
  %s7 = inlined_call_operand.vmem [shape: f32[1,128], index: 7, kind: input, shape index: {}]
  %s8 = inlined_call_operand.hbm [shape: f32[8,128], index: 8, kind: output, shape index: {}]
  %s9 = sld [smem:[#allocation0]]
  $region42: #{tpu_custom_call.1} parent=0
    _
  %s11 = ssub.s32 1, %s9
  %s12 = scalar_select 0, %s11, %s9
  $region1: #{tpu_custom_call.1} parent=0
    #allocation2 [shape = 'u8[4096]{0}', space=vmem, size = 0x1000, scoped, tag = 'output window, operand 0, single buffered']
    #allocation3 [shape = 's32[1]{0}', space=sflag, size = 0x4, scoped, tag = 'scoped memory for tpu_custom_call.1']
    %13 = vsyncpa [#allocation3], 0
    // Predicated region
    $region2: #{tpu_custom_call.1} parent=1 // pred_check
      _
    $region3: #{tpu_custom_call.1} parent=1 // pred_check_branch
      %15 = sbr.rel (0) target = $region5
    $region4: #{tpu_custom_call.1} parent=1 // pred_region
      _
    $region5: #{tpu_custom_call.1} parent=1 // pred_fallthru
      _
    // Predicated region
    $region6: #{tpu_custom_call.1} parent=1 // pred_check
      _
    $region7: #{tpu_custom_call.1} parent=1 // pred_check_branch
      %17 = sbr.rel (0) target = $region9
    $region8: #{tpu_custom_call.1} parent=1 // pred_region
      _
    $region9: #{tpu_custom_call.1} parent=1 // pred_fallthru
      _
    // Predicated region
    $region10: #{tpu_custom_call.1} parent=1 // pred_check
      _
    $region11: #{tpu_custom_call.1} parent=1 // pred_check_branch
      %19 = sbr.rel (0) target = $region13
    $region12: #{tpu_custom_call.1} parent=1 // pred_region
      _
    $region13: #{tpu_custom_call.1} parent=1 // pred_fallthru
      _
    // Predicated region
    $region14: #{tpu_custom_call.1} parent=1 // pred_check
      _
    $region15: #{tpu_custom_call.1} parent=1 // pred_check_branch
      %21 = sbr.rel (0) target = $region17
    $region16: #{tpu_custom_call.1} parent=1 // pred_region
      _
    $region17: #{tpu_custom_call.1} parent=1 // pred_fallthru
      _
    // Predicated region
    $region18: #{tpu_custom_call.1} parent=1 // pred_check
      _
    $region19: #{tpu_custom_call.1} parent=1 // pred_check_branch
      %23 = sbr.rel (0) target = $region21
    $region20: #{tpu_custom_call.1} parent=1 // pred_region
      _
    $region21: #{tpu_custom_call.1} parent=1 // pred_fallthru
      _
    // Predicated region
    $region22: #{tpu_custom_call.1} parent=1 // pred_check
      _
    $region23: #{tpu_custom_call.1} parent=1 // pred_check_branch
      %25 = sbr.rel (0) target = $region25
    $region24: #{tpu_custom_call.1} parent=1 // pred_region
      _
    $region25: #{tpu_custom_call.1} parent=1 // pred_fallthru
      _
    // Predicated region
    $region26: #{tpu_custom_call.1} parent=1 // pred_check
      _
    $region27: #{tpu_custom_call.1} parent=1 // pred_check_branch
      %27 = sbr.rel (0) target = $region29
    $region28: #{tpu_custom_call.1} parent=1 // pred_region
      _
    $region29: #{tpu_custom_call.1} parent=1 // pred_fallthru
      _
    // Predicated region
    $region30: #{tpu_custom_call.1} parent=1 // pred_check
      _
    $region31: #{tpu_custom_call.1} parent=1 // pred_check_branch
      %29 = sbr.rel (0) target = $region33
    $region32: #{tpu_custom_call.1} parent=1 // pred_region
      _
    $region33: #{tpu_custom_call.1} parent=1 // pred_fallthru
      _
    %v31 = vld [vmem:[%s0] sm:$0xff]
    %v32 = vld [vmem:[%s0 + $0x8] sm:$0xff]
    %v33 = vld [vmem:[%s0 + $0x10] sm:$0xff]
    %v34 = vld [vmem:[%s0 + $0x18] sm:$0xff]
    %v35 = vld [vmem:[%s0 + $0x20] sm:$0xff]
    %v36 = vld [vmem:[%s0 + $0x28] sm:$0xff]
    %v37 = vld [vmem:[%s0 + $0x30] sm:$0xff]
    %v38 = vld [vmem:[%s0 + $0x38] sm:$0xff]
    %v39 = vld [vmem:[%s1] sm:$0x3]
    %v40 = vld [vmem:[%s3] sm:$0xff]
    %v41 = vld [vmem:[%s3 + $0x8] sm:$0xff]
    %v42 = vld [vmem:[%s3 + $0x10] sm:$0xff]
    %v43 = vld [vmem:[%s3 + $0x18] sm:$0xff]
    %v44 = vld [vmem:[%s4] sm:$0xf]
    %v45 = vld [vmem:[%s4 + $0x4] sm:$0xf]
    %v46 = vld [vmem:[%s4 + $0x8] sm:$0xf]
    %v47 = vld [vmem:[%s4 + $0xc] sm:$0xf]
    %v48 = vld [vmem:[%s6] sm:$0xf]
    %v49 = vld [vmem:[%s6 + $0x4] sm:$0xf]
    %v50 = vld [vmem:[%s6 + $0x8] sm:$0xf]
    %v51 = vld [vmem:[%s6 + $0xc] sm:$0xf]
    %v52 = vld [vmem:[%s7] sm:$0x1]
    %v53 = vld [vmem:[%s5] sm:$0x1]
    %v55 = vlaneseq
    %v56 = vshrl.u32 %v55, 7
    %v57 = vsub.s32 0, %v56
    %v58 = vrot.slane %v53, %v57
    %v60 = vld [vmem:[%s2] sm:$0x1]
    %v62 = vlaneseq
    %v63 = vshrl.u32 %v62, 7
    %v64 = vsub.s32 0, %v63
    %v65 = vrot.slane %v60, %v64
    %68 = vset.pattern.permute.xlu0 0
    %69 = vperm.xlu0 %68, %v31
    %v70 = vpop.permute.xlu0 %69
    %73 = vset.pattern.permute.xlu0 0
    %74 = vperm.xlu0 %73, %v32
    %v75 = vpop.permute.xlu0 %74
    %78 = vset.pattern.permute.xlu0 0
    %79 = vperm.xlu0 %78, %v33
    %v80 = vpop.permute.xlu0 %79
    %83 = vset.pattern.permute.xlu0 0
    %84 = vperm.xlu0 %83, %v34
    %v85 = vpop.permute.xlu0 %84
    %88 = vset.pattern.permute.xlu0 0
    %89 = vperm.xlu0 %88, %v35
    %v90 = vpop.permute.xlu0 %89
    %93 = vset.pattern.permute.xlu0 0
    %94 = vperm.xlu0 %93, %v36
    %v95 = vpop.permute.xlu0 %94
    %98 = vset.pattern.permute.xlu0 0
    %99 = vperm.xlu0 %98, %v37
    %v100 = vpop.permute.xlu0 %99
    %103 = vset.pattern.permute.xlu0 0
    %104 = vperm.xlu0 %103, %v38
    %v105 = vpop.permute.xlu0 %104
    %v107 = vlaneseq
    %v108 = vshrl.u32 %v107, 7
    %v109 = vsub.s32 0, %v108
    %v110 = vrot.slane %v39, %v109
    %v111 = vmul.f32 %v70, %v110
    %v112 = vmul.f32 %v75, %v110
    %v113 = vmul.f32 %v80, %v110
    %v114 = vmul.f32 %v85, %v110
    %v115 = vmul.f32 %v90, %v110
    %v116 = vmul.f32 %v95, %v110
    %v117 = vmul.f32 %v100, %v110
    %v118 = vmul.f32 %v105, %v110
    %v119 = vadd.f32 %v65, %v111
    %v120 = vadd.f32 %v65, %v112
    %v121 = vadd.f32 %v65, %v113
    %v122 = vadd.f32 %v65, %v114
    %v123 = vadd.f32 %v65, %v115
    %v124 = vadd.f32 %v65, %v116
    %v125 = vadd.f32 %v65, %v117
    %v126 = vadd.f32 %v65, %v118
    %127 = vset.pattern.permute.xlu0 1
    %128 = vperm.xlu0 %127, %v31
    %v129 = vpop.permute.xlu0 %128
    %131 = vset.pattern.permute.xlu0 1
    %132 = vperm.xlu0 %131, %v32
    %v133 = vpop.permute.xlu0 %132
    %135 = vset.pattern.permute.xlu0 1
    %136 = vperm.xlu0 %135, %v33
    %v137 = vpop.permute.xlu0 %136
    %139 = vset.pattern.permute.xlu0 1
    %140 = vperm.xlu0 %139, %v34
    %v141 = vpop.permute.xlu0 %140
    %143 = vset.pattern.permute.xlu0 1
    %144 = vperm.xlu0 %143, %v35
    %v145 = vpop.permute.xlu0 %144
    %147 = vset.pattern.permute.xlu0 1
    %148 = vperm.xlu0 %147, %v36
    %v149 = vpop.permute.xlu0 %148
    %151 = vset.pattern.permute.xlu0 1
    %152 = vperm.xlu0 %151, %v37
    %v153 = vpop.permute.xlu0 %152
    %155 = vset.pattern.permute.xlu0 1
    %156 = vperm.xlu0 %155, %v38
    %v157 = vpop.permute.xlu0 %156
    %v159 = vlaneseq
    %v160 = vshrl.u32 %v159, 7
    %v161 = vsub.s32 1, %v160
    %v162 = vrot.slane %v39, %v161
    %v163 = vmul.f32 %v129, %v162
    %v164 = vmul.f32 %v133, %v162
    %v165 = vmul.f32 %v137, %v162
    %v166 = vmul.f32 %v141, %v162
    %v167 = vmul.f32 %v145, %v162
    %v168 = vmul.f32 %v149, %v162
    %v169 = vmul.f32 %v153, %v162
    %v170 = vmul.f32 %v157, %v162
    %v171 = vadd.f32 %v119, %v163
    %v172 = vadd.f32 %v120, %v164
    %v173 = vadd.f32 %v121, %v165
    %v174 = vadd.f32 %v122, %v166
    %v175 = vadd.f32 %v123, %v167
    %v176 = vadd.f32 %v124, %v168
    %v177 = vadd.f32 %v125, %v169
    %v178 = vadd.f32 %v126, %v170
    %v179 = vadd.f32 %v171, 0.0
    %v180 = vxor.u32 %v179, 2147483648
    %v181 = vmul.f32 %v180, 1.442695
    %v182 = vpow.pop %v181
    %v183 = vadd.f32 %v182, 1.0
    %v184 = vrcp.pop %v183
    %v185 = vmul.f32 1.0, %v184
    %v186 = vtanh.pop %v179
    %v187 = vmul.f32 %v185, 0.0
    %189 = vrot.lane.b32.xlu0 %v186, 64
    %v190 = vpop.permute.xlu0 %189
    %v192 = vmul.f32 %v185, %v190
    %194 = vrot.lane.b32.xlu0 %v192, 32
    %v195 = vpop.permute.xlu0 %194
    %v197 = vadd.f32 %v187, %v195
    %v198 = vtanh.pop %v197
    %200 = vrot.lane.b32.xlu0 %v198, 64
    %v201 = vpop.permute.xlu0 %200
    %v203 = vmul.f32 %v185, %v201
    %v204 = vpack.c.bf16 %v203, %v203
    %206 = vrot.lane.b32.xlu0 %v204, 32
    %v207 = vpop.permute.xlu0 %206
    %v212 = vunpack.c.l.b16 %v40
    %v213 = vunpack.c.h.b16 %v40
    %v214 = vunpack.c.l.b16 %v41
    %v215 = vunpack.c.h.b16 %v41
    %v216 = vunpack.c.l.b16 %v42
    %v217 = vunpack.c.h.b16 %v42
    %v218 = vunpack.c.l.b16 %v43
    %v219 = vunpack.c.h.b16 %v43
    %v220 = vpack.c.b16 %v214, %v212
    %v221 = vpack.c.b16 %v215, %v213
    %v222 = vpack.c.b16 %v218, %v216
    %v223 = vpack.c.b16 %v219, %v217
    %vm228 = vcmask 261120
    %v230 = vsel %vm228, %v207, 0
    %232 = vmatprep.subr.bf16.mxu0 0
    %233 = vmatpush1.bf16.msra.mxu0 0
    %234 = vmatprep.subr.bf16.mxu0 0
    %235 = vmatpush1.bf16.msra.mxu0 0
    %236 = vmatprep.subr.bf16.mxu0 0
    %237 = vmatpush1.bf16.msra.mxu0 0
    %238 = vmatprep.subr.bf16.mxu0 0
    %239 = vmatpush1.bf16.msra.mxu0 0
    %240 = vmatprep.subr.bf16.mxu0 0
    %241 = vmatpush1.bf16.msra.mxu0 0
    %242 = vmatprep.subr.bf16.mxu0 0
    %243 = vmatpush1.bf16.msra.mxu0 0
    %244 = vmatprep.subr.bf16.mxu0 %v223
    %245 = vmatpush1.bf16.msra.mxu0 %v222
    %246 = vmatprep.subr.bf16.mxu0 %v221
    %247 = vmatpush1.bf16.msra.mxu0 %v220
    %248 = vmatprep.subr.bf16.mxu0 0
    %249 = vmatpush2.bf16.msra.mxu0 0
    %250 = vmatprep.subr.bf16.mxu0 0
    %251 = vmatpush2.bf16.msra.mxu0 0
    %252 = vmatprep.subr.bf16.mxu0 0
    %253 = vmatpush2.bf16.msra.mxu0 0
    %254 = vmatprep.subr.bf16.mxu0 0
    %255 = vmatpush2.bf16.msra.mxu0 0
    %256 = vmatprep.subr.bf16.mxu0 0
    %257 = vmatpush2.bf16.msra.mxu0 0
    %258 = vmatprep.subr.bf16.mxu0 0
    %259 = vmatpush2.bf16.msra.mxu0 0
    %260 = vmatprep.subr.bf16.mxu0 0
    %261 = vmatpush2.bf16.msra.mxu0 0
    %262 = vmatprep.subr.bf16.mxu0 0
    %263 = vmatpush2.bf16.msra.mxu0 0
    %264 = vmatprep.mubr.bf16.mxu0 0
    %265 = vmatmul.mubr.bf16.gmra.mxu0 %v230
    %v266 = vpop.f32.mrf.mxu0
    %v267 = vadd.f32 0.0, %v266
    %v268 = vpop.f32.mrf.mxu0
    %v269 = vadd.f32 0.0, %v268
    %v270 = vpop.f32.mrf.mxu0
    %v271 = vpop.f32.mrf.mxu0
    %272 = vdwg.mxu0
    %v277 = vunpack.c.l.b16 %v44
    %v278 = vunpack.c.l.b16 %v45
    %v279 = vunpack.c.l.b16 %v46
    %v280 = vunpack.c.l.b16 %v47
    %v281 = vpack.c.b16 %v278, %v277
    %v282 = vpack.c.b16 %v280, %v279
    %v286 = vsel %vm228, 0, 0
    %288 = vmatprep.subr.bf16.mxu0 0
    %289 = vmatpush1.bf16.msra.mxu0 0
    %290 = vmatprep.subr.bf16.mxu0 0
    %291 = vmatpush1.bf16.msra.mxu0 0
    %292 = vmatprep.subr.bf16.mxu0 0
    %293 = vmatpush1.bf16.msra.mxu0 0
    %294 = vmatprep.subr.bf16.mxu0 0
    %295 = vmatpush1.bf16.msra.mxu0 0
    %296 = vmatprep.subr.bf16.mxu0 0
    %297 = vmatpush1.bf16.msra.mxu0 0
    %298 = vmatprep.subr.bf16.mxu0 0
    %299 = vmatpush1.bf16.msra.mxu0 0
    %300 = vmatprep.subr.bf16.mxu0 0
    %301 = vmatpush1.bf16.msra.mxu0 %v282
    %302 = vmatprep.subr.bf16.mxu0 0
    %303 = vmatpush1.bf16.msra.mxu0 %v281
    %304 = vmatprep.subr.bf16.mxu0 0
    %305 = vmatpush2.bf16.msra.mxu0 0
    %306 = vmatprep.subr.bf16.mxu0 0
    %307 = vmatpush2.bf16.msra.mxu0 0
    %308 = vmatprep.subr.bf16.mxu0 0
    %309 = vmatpush2.bf16.msra.mxu0 0
    %310 = vmatprep.subr.bf16.mxu0 0
    %311 = vmatpush2.bf16.msra.mxu0 0
    %312 = vmatprep.subr.bf16.mxu0 0
    %313 = vmatpush2.bf16.msra.mxu0 0
    %314 = vmatprep.subr.bf16.mxu0 0
    %315 = vmatpush2.bf16.msra.mxu0 0
    %316 = vmatprep.subr.bf16.mxu0 0
    %317 = vmatpush2.bf16.msra.mxu0 0
    %318 = vmatprep.subr.bf16.mxu0 0
    %319 = vmatpush2.bf16.msra.mxu0 0
    %320 = vmatprep.mubr.bf16.mxu0 0
    %321 = vmatmul.mubr.bf16.gmra.mxu0 %v286
    %v322 = vpop.f32.mrf.mxu0
    %v323 = vadd.f32 0.0, %v322
    %v324 = vpop.f32.mrf.mxu0
    %v325 = vpop.f32.mrf.mxu0
    %v326 = vpop.f32.mrf.mxu0
    %327 = vdwg.mxu0
    %v328 = vadd.f32 %v269, %v323
    %v329 = vadd.f32 %v328, %v58
    %v330 = vxor.u32 %v329, 2147483648
    %v331 = vmul.f32 %v330, 1.442695
    %v332 = vpow.pop %v331
    %v333 = vadd.f32 %v332, 1.0
    %v334 = vrcp.pop %v333
    %v335 = vmul.f32 1.0, %v334
    %v336 = vtanh.pop %v329
    %v337 = vmul.f32 %v335, 0.0
    %339 = vrot.lane.b32.xlu0 %v336, 64
    %v340 = vpop.permute.xlu0 %339
    %v342 = vmul.f32 %v335, %v340
    %344 = vrot.lane.b32.xlu0 %v342, 32
    %v345 = vpop.permute.xlu0 %344
    %v347 = vadd.f32 %v337, %v345
    %v348 = vtanh.pop %v347
    %350 = vrot.lane.b32.xlu0 %v348, 64
    %v351 = vpop.permute.xlu0 %350
    %v353 = vmul.f32 %v335, %v351
    %v354 = vadd.f32 %v172, %v267
    %v355 = vxor.u32 %v354, 2147483648
    %v356 = vmul.f32 %v355, 1.442695
    %v357 = vpow.pop %v356
    %v358 = vadd.f32 %v357, 1.0
    %v359 = vrcp.pop %v358
    %v360 = vmul.f32 1.0, %v359
    %v361 = vtanh.pop %v354
    %v362 = vmul.f32 %v360, %v197
    %364 = vrot.lane.b32.xlu0 %v361, 64
    %v365 = vpop.permute.xlu0 %364
    %v367 = vmul.f32 %v360, %v365
    %369 = vrot.lane.b32.xlu0 %v367, 32
    %v370 = vpop.permute.xlu0 %369
    %v372 = vadd.f32 %v362, %v370
    %v373 = vtanh.pop %v372
    %375 = vrot.lane.b32.xlu0 %v373, 64
    %v376 = vpop.permute.xlu0 %375
    %v378 = vmul.f32 %v360, %v376
    %v379 = vpack.c.bf16 %v378, %v378
    %381 = vrot.lane.b32.xlu0 %v379, 32
    %v382 = vpop.permute.xlu0 %381
    %v384 = vsel %vm228, %v382, 0
    %386 = vmatprep.subr.bf16.mxu0 0
    %387 = vmatpush1.bf16.msra.mxu0 0
    %388 = vmatprep.subr.bf16.mxu0 0
    %389 = vmatpush1.bf16.msra.mxu0 0
    %390 = vmatprep.subr.bf16.mxu0 0
    %391 = vmatpush1.bf16.msra.mxu0 0
    %392 = vmatprep.subr.bf16.mxu0 0
    %393 = vmatpush1.bf16.msra.mxu0 0
    %394 = vmatprep.subr.bf16.mxu0 0
    %395 = vmatpush1.bf16.msra.mxu0 0
    %396 = vmatprep.subr.bf16.mxu0 0
    %397 = vmatpush1.bf16.msra.mxu0 0
    %398 = vmatprep.subr.bf16.mxu0 %v223
    %399 = vmatpush1.bf16.msra.mxu0 %v222
    %400 = vmatprep.subr.bf16.mxu0 %v221
    %401 = vmatpush1.bf16.msra.mxu0 %v220
    %402 = vmatprep.subr.bf16.mxu0 0
    %403 = vmatpush2.bf16.msra.mxu0 0
    %404 = vmatprep.subr.bf16.mxu0 0
    %405 = vmatpush2.bf16.msra.mxu0 0
    %406 = vmatprep.subr.bf16.mxu0 0
    %407 = vmatpush2.bf16.msra.mxu0 0
    %408 = vmatprep.subr.bf16.mxu0 0
    %409 = vmatpush2.bf16.msra.mxu0 0
    %410 = vmatprep.subr.bf16.mxu0 0
    %411 = vmatpush2.bf16.msra.mxu0 0
    %412 = vmatprep.subr.bf16.mxu0 0
    %413 = vmatpush2.bf16.msra.mxu0 0
    %414 = vmatprep.subr.bf16.mxu0 0
    %415 = vmatpush2.bf16.msra.mxu0 0
    %416 = vmatprep.subr.bf16.mxu0 0
    %417 = vmatpush2.bf16.msra.mxu0 0
    %418 = vmatprep.mubr.bf16.mxu0 0
    %419 = vmatmul.mubr.bf16.gmra.mxu0 %v384
    %v420 = vpop.f32.mrf.mxu0
    %v421 = vadd.f32 0.0, %v420
    %v422 = vpop.f32.mrf.mxu0
    %v423 = vadd.f32 0.0, %v422
    %v424 = vpop.f32.mrf.mxu0
    %v425 = vpop.f32.mrf.mxu0
    %426 = vdwg.mxu0
    %v427 = vpack.c.bf16 %v353, %v353
    %429 = vrot.lane.b32.xlu0 %v427, 32
    %v430 = vpop.permute.xlu0 %429
    %v432 = vsel %vm228, %v430, 0
    %434 = vmatprep.subr.bf16.mxu0 0
    %435 = vmatpush1.bf16.msra.mxu0 0
    %436 = vmatprep.subr.bf16.mxu0 0
    %437 = vmatpush1.bf16.msra.mxu0 0
    %438 = vmatprep.subr.bf16.mxu0 0
    %439 = vmatpush1.bf16.msra.mxu0 0
    %440 = vmatprep.subr.bf16.mxu0 0
    %441 = vmatpush1.bf16.msra.mxu0 0
    %442 = vmatprep.subr.bf16.mxu0 0
    %443 = vmatpush1.bf16.msra.mxu0 0
    %444 = vmatprep.subr.bf16.mxu0 0
    %445 = vmatpush1.bf16.msra.mxu0 0
    %446 = vmatprep.subr.bf16.mxu0 0
    %447 = vmatpush1.bf16.msra.mxu0 %v282
    %448 = vmatprep.subr.bf16.mxu0 0
    %449 = vmatpush1.bf16.msra.mxu0 %v281
    %450 = vmatprep.subr.bf16.mxu0 0
    %451 = vmatpush2.bf16.msra.mxu0 0
    %452 = vmatprep.subr.bf16.mxu0 0
    %453 = vmatpush2.bf16.msra.mxu0 0
    %454 = vmatprep.subr.bf16.mxu0 0
    %455 = vmatpush2.bf16.msra.mxu0 0
    %456 = vmatprep.subr.bf16.mxu0 0
    %457 = vmatpush2.bf16.msra.mxu0 0
    %458 = vmatprep.subr.bf16.mxu0 0
    %459 = vmatpush2.bf16.msra.mxu0 0
    %460 = vmatprep.subr.bf16.mxu0 0
    %461 = vmatpush2.bf16.msra.mxu0 0
    %462 = vmatprep.subr.bf16.mxu0 0
    %463 = vmatpush2.bf16.msra.mxu0 0
    %464 = vmatprep.subr.bf16.mxu0 0
    %465 = vmatpush2.bf16.msra.mxu0 0
    %466 = vmatprep.mubr.bf16.mxu0 0
    %467 = vmatmul.mubr.bf16.gmra.mxu0 %v432
    %v468 = vpop.f32.mrf.mxu0
    %v469 = vadd.f32 0.0, %v468
    %v470 = vpop.f32.mrf.mxu0
    %v471 = vpop.f32.mrf.mxu0
    %v472 = vpop.f32.mrf.mxu0
    %473 = vdwg.mxu0
    %v474 = vadd.f32 %v423, %v469
    %v475 = vadd.f32 %v474, %v58
    %v476 = vxor.u32 %v475, 2147483648
    %v477 = vmul.f32 %v476, 1.442695
    %v478 = vpow.pop %v477
    %v479 = vadd.f32 %v478, 1.0
    %v480 = vrcp.pop %v479
    %v481 = vmul.f32 1.0, %v480
    %v482 = vtanh.pop %v475
    %v483 = vmul.f32 %v481, %v347
    %485 = vrot.lane.b32.xlu0 %v482, 64
    %v486 = vpop.permute.xlu0 %485
    %v488 = vmul.f32 %v481, %v486
    %490 = vrot.lane.b32.xlu0 %v488, 32
    %v491 = vpop.permute.xlu0 %490
    %v493 = vadd.f32 %v483, %v491
    %v494 = vtanh.pop %v493
    %496 = vrot.lane.b32.xlu0 %v494, 64
    %v497 = vpop.permute.xlu0 %496
    %v499 = vmul.f32 %v481, %v497
    %v500 = vadd.f32 %v173, %v421
    %v501 = vxor.u32 %v500, 2147483648
    %v502 = vmul.f32 %v501, 1.442695
    %v503 = vpow.pop %v502
    %v504 = vadd.f32 %v503, 1.0
    %v505 = vrcp.pop %v504
    %v506 = vmul.f32 1.0, %v505
    %v507 = vtanh.pop %v500
    %v508 = vmul.f32 %v506, %v372
    %510 = vrot.lane.b32.xlu0 %v507, 64
    %v511 = vpop.permute.xlu0 %510
    %v513 = vmul.f32 %v506, %v511
    %515 = vrot.lane.b32.xlu0 %v513, 32
    %v516 = vpop.permute.xlu0 %515
    %v518 = vadd.f32 %v508, %v516
    %v519 = vtanh.pop %v518
    %521 = vrot.lane.b32.xlu0 %v519, 64
    %v522 = vpop.permute.xlu0 %521
    %v524 = vmul.f32 %v506, %v522
    %v525 = vpack.c.bf16 %v524, %v524
    %527 = vrot.lane.b32.xlu0 %v525, 32
    %v528 = vpop.permute.xlu0 %527
    %v530 = vsel %vm228, %v528, 0
    %532 = vmatprep.subr.bf16.mxu0 0
    %533 = vmatpush1.bf16.msra.mxu0 0
    %534 = vmatprep.subr.bf16.mxu0 0
    %535 = vmatpush1.bf16.msra.mxu0 0
    %536 = vmatprep.subr.bf16.mxu0 0
    %537 = vmatpush1.bf16.msra.mxu0 0
    %538 = vmatprep.subr.bf16.mxu0 0
    %539 = vmatpush1.bf16.msra.mxu0 0
    %540 = vmatprep.subr.bf16.mxu0 0
    %541 = vmatpush1.bf16.msra.mxu0 0
    %542 = vmatprep.subr.bf16.mxu0 0
    %543 = vmatpush1.bf16.msra.mxu0 0
    %544 = vmatprep.subr.bf16.mxu0 %v223
    %545 = vmatpush1.bf16.msra.mxu0 %v222
    %546 = vmatprep.subr.bf16.mxu0 %v221
    %547 = vmatpush1.bf16.msra.mxu0 %v220
    %548 = vmatprep.subr.bf16.mxu0 0
    %549 = vmatpush2.bf16.msra.mxu0 0
    %550 = vmatprep.subr.bf16.mxu0 0
    %551 = vmatpush2.bf16.msra.mxu0 0
    %552 = vmatprep.subr.bf16.mxu0 0
    %553 = vmatpush2.bf16.msra.mxu0 0
    %554 = vmatprep.subr.bf16.mxu0 0
    %555 = vmatpush2.bf16.msra.mxu0 0
    %556 = vmatprep.subr.bf16.mxu0 0
    %557 = vmatpush2.bf16.msra.mxu0 0
    %558 = vmatprep.subr.bf16.mxu0 0
    %559 = vmatpush2.bf16.msra.mxu0 0
    %560 = vmatprep.subr.bf16.mxu0 0
    %561 = vmatpush2.bf16.msra.mxu0 0
    %562 = vmatprep.subr.bf16.mxu0 0
    %563 = vmatpush2.bf16.msra.mxu0 0
    %564 = vmatprep.mubr.bf16.mxu0 0
    %565 = vmatmul.mubr.bf16.gmra.mxu0 %v530
    %v566 = vpop.f32.mrf.mxu0
    %v567 = vadd.f32 0.0, %v566
    %v568 = vpop.f32.mrf.mxu0
    %v569 = vadd.f32 0.0, %v568
    %v570 = vpop.f32.mrf.mxu0
    %v571 = vpop.f32.mrf.mxu0
    %572 = vdwg.mxu0
    %v573 = vpack.c.bf16 %v499, %v499
    %575 = vrot.lane.b32.xlu0 %v573, 32
    %v576 = vpop.permute.xlu0 %575
    %v578 = vsel %vm228, %v576, 0
    %580 = vmatprep.subr.bf16.mxu0 0
    %581 = vmatpush1.bf16.msra.mxu0 0
    %582 = vmatprep.subr.bf16.mxu0 0
    %583 = vmatpush1.bf16.msra.mxu0 0
    %584 = vmatprep.subr.bf16.mxu0 0
    %585 = vmatpush1.bf16.msra.mxu0 0
    %586 = vmatprep.subr.bf16.mxu0 0
    %587 = vmatpush1.bf16.msra.mxu0 0
    %588 = vmatprep.subr.bf16.mxu0 0
    %589 = vmatpush1.bf16.msra.mxu0 0
    %590 = vmatprep.subr.bf16.mxu0 0
    %591 = vmatpush1.bf16.msra.mxu0 0
    %592 = vmatprep.subr.bf16.mxu0 0
    %593 = vmatpush1.bf16.msra.mxu0 %v282
    %594 = vmatprep.subr.bf16.mxu0 0
    %595 = vmatpush1.bf16.msra.mxu0 %v281
    %596 = vmatprep.subr.bf16.mxu0 0
    %597 = vmatpush2.bf16.msra.mxu0 0
    %598 = vmatprep.subr.bf16.mxu0 0
    %599 = vmatpush2.bf16.msra.mxu0 0
    %600 = vmatprep.subr.bf16.mxu0 0
    %601 = vmatpush2.bf16.msra.mxu0 0
    %602 = vmatprep.subr.bf16.mxu0 0
    %603 = vmatpush2.bf16.msra.mxu0 0
    %604 = vmatprep.subr.bf16.mxu0 0
    %605 = vmatpush2.bf16.msra.mxu0 0
    %606 = vmatprep.subr.bf16.mxu0 0
    %607 = vmatpush2.bf16.msra.mxu0 0
    %608 = vmatprep.subr.bf16.mxu0 0
    %609 = vmatpush2.bf16.msra.mxu0 0
    %610 = vmatprep.subr.bf16.mxu0 0
    %611 = vmatpush2.bf16.msra.mxu0 0
    %612 = vmatprep.mubr.bf16.mxu0 0
    %613 = vmatmul.mubr.bf16.gmra.mxu0 %v578
    %v614 = vpop.f32.mrf.mxu0
    %v615 = vadd.f32 0.0, %v614
    %v616 = vpop.f32.mrf.mxu0
    %v617 = vpop.f32.mrf.mxu0
    %v618 = vpop.f32.mrf.mxu0
    %619 = vdwg.mxu0
    %v620 = vadd.f32 %v569, %v615
    %v621 = vadd.f32 %v620, %v58
    %v622 = vxor.u32 %v621, 2147483648
    %v623 = vmul.f32 %v622, 1.442695
    %v624 = vpow.pop %v623
    %v625 = vadd.f32 %v624, 1.0
    %v626 = vrcp.pop %v625
    %v627 = vmul.f32 1.0, %v626
    %v628 = vtanh.pop %v621
    %v629 = vmul.f32 %v627, %v493
    %631 = vrot.lane.b32.xlu0 %v628, 64
    %v632 = vpop.permute.xlu0 %631
    %v634 = vmul.f32 %v627, %v632
    %636 = vrot.lane.b32.xlu0 %v634, 32
    %v637 = vpop.permute.xlu0 %636
    %v639 = vadd.f32 %v629, %v637
    %v640 = vtanh.pop %v639
    %642 = vrot.lane.b32.xlu0 %v640, 64
    %v643 = vpop.permute.xlu0 %642
    %v645 = vmul.f32 %v627, %v643
    %v646 = vadd.f32 %v174, %v567
    %v647 = vxor.u32 %v646, 2147483648
    %v648 = vmul.f32 %v647, 1.442695
    %v649 = vpow.pop %v648
    %v650 = vadd.f32 %v649, 1.0
    %v651 = vrcp.pop %v650
    %v652 = vmul.f32 1.0, %v651
    %v653 = vtanh.pop %v646
    %v654 = vmul.f32 %v652, %v518
    %656 = vrot.lane.b32.xlu0 %v653, 64
    %v657 = vpop.permute.xlu0 %656
    %v659 = vmul.f32 %v652, %v657
    %661 = vrot.lane.b32.xlu0 %v659, 32
    %v662 = vpop.permute.xlu0 %661
    %v664 = vadd.f32 %v654, %v662
    %v665 = vtanh.pop %v664
    %667 = vrot.lane.b32.xlu0 %v665, 64
    %v668 = vpop.permute.xlu0 %667
    %v670 = vmul.f32 %v652, %v668
    %v671 = vpack.c.bf16 %v670, %v670
    %673 = vrot.lane.b32.xlu0 %v671, 32
    %v674 = vpop.permute.xlu0 %673
    %v676 = vsel %vm228, %v674, 0
    %678 = vmatprep.subr.bf16.mxu0 0
    %679 = vmatpush1.bf16.msra.mxu0 0
    %680 = vmatprep.subr.bf16.mxu0 0
    %681 = vmatpush1.bf16.msra.mxu0 0
    %682 = vmatprep.subr.bf16.mxu0 0
    %683 = vmatpush1.bf16.msra.mxu0 0
    %684 = vmatprep.subr.bf16.mxu0 0
    %685 = vmatpush1.bf16.msra.mxu0 0
    %686 = vmatprep.subr.bf16.mxu0 0
    %687 = vmatpush1.bf16.msra.mxu0 0
    %688 = vmatprep.subr.bf16.mxu0 0
    %689 = vmatpush1.bf16.msra.mxu0 0
    %690 = vmatprep.subr.bf16.mxu0 %v223
    %691 = vmatpush1.bf16.msra.mxu0 %v222
    %692 = vmatprep.subr.bf16.mxu0 %v221
    %693 = vmatpush1.bf16.msra.mxu0 %v220
    %694 = vmatprep.subr.bf16.mxu0 0
    %695 = vmatpush2.bf16.msra.mxu0 0
    %696 = vmatprep.subr.bf16.mxu0 0
    %697 = vmatpush2.bf16.msra.mxu0 0
    %698 = vmatprep.subr.bf16.mxu0 0
    %699 = vmatpush2.bf16.msra.mxu0 0
    %700 = vmatprep.subr.bf16.mxu0 0
    %701 = vmatpush2.bf16.msra.mxu0 0
    %702 = vmatprep.subr.bf16.mxu0 0
    %703 = vmatpush2.bf16.msra.mxu0 0
    %704 = vmatprep.subr.bf16.mxu0 0
    %705 = vmatpush2.bf16.msra.mxu0 0
    %706 = vmatprep.subr.bf16.mxu0 0
    %707 = vmatpush2.bf16.msra.mxu0 0
    %708 = vmatprep.subr.bf16.mxu0 0
    %709 = vmatpush2.bf16.msra.mxu0 0
    %710 = vmatprep.mubr.bf16.mxu0 0
    %711 = vmatmul.mubr.bf16.gmra.mxu0 %v676
    %v712 = vpop.f32.mrf.mxu0
    %v713 = vadd.f32 0.0, %v712
    %v714 = vpop.f32.mrf.mxu0
    %v715 = vadd.f32 0.0, %v714
    %v716 = vpop.f32.mrf.mxu0
    %v717 = vpop.f32.mrf.mxu0
    %718 = vdwg.mxu0
    %v719 = vpack.c.bf16 %v645, %v645
    %721 = vrot.lane.b32.xlu0 %v719, 32
    %v722 = vpop.permute.xlu0 %721
    %v724 = vsel %vm228, %v722, 0
    %726 = vmatprep.subr.bf16.mxu0 0
    %727 = vmatpush1.bf16.msra.mxu0 0
    %728 = vmatprep.subr.bf16.mxu0 0
    %729 = vmatpush1.bf16.msra.mxu0 0
    %730 = vmatprep.subr.bf16.mxu0 0
    %731 = vmatpush1.bf16.msra.mxu0 0
    %732 = vmatprep.subr.bf16.mxu0 0
    %733 = vmatpush1.bf16.msra.mxu0 0
    %734 = vmatprep.subr.bf16.mxu0 0
    %735 = vmatpush1.bf16.msra.mxu0 0
    %736 = vmatprep.subr.bf16.mxu0 0
    %737 = vmatpush1.bf16.msra.mxu0 0
    %738 = vmatprep.subr.bf16.mxu0 0
    %739 = vmatpush1.bf16.msra.mxu0 %v282
    %740 = vmatprep.subr.bf16.mxu0 0
    %741 = vmatpush1.bf16.msra.mxu0 %v281
    %742 = vmatprep.subr.bf16.mxu0 0
    %743 = vmatpush2.bf16.msra.mxu0 0
    %744 = vmatprep.subr.bf16.mxu0 0
    %745 = vmatpush2.bf16.msra.mxu0 0
    %746 = vmatprep.subr.bf16.mxu0 0
    %747 = vmatpush2.bf16.msra.mxu0 0
    %748 = vmatprep.subr.bf16.mxu0 0
    %749 = vmatpush2.bf16.msra.mxu0 0
    %750 = vmatprep.subr.bf16.mxu0 0
    %751 = vmatpush2.bf16.msra.mxu0 0
    %752 = vmatprep.subr.bf16.mxu0 0
    %753 = vmatpush2.bf16.msra.mxu0 0
    %754 = vmatprep.subr.bf16.mxu0 0
    %755 = vmatpush2.bf16.msra.mxu0 0
    %756 = vmatprep.subr.bf16.mxu0 0
    %757 = vmatpush2.bf16.msra.mxu0 0
    %758 = vmatprep.mubr.bf16.mxu0 0
    %759 = vmatmul.mubr.bf16.gmra.mxu0 %v724
    %v760 = vpop.f32.mrf.mxu0
    %v761 = vadd.f32 0.0, %v760
    %v762 = vpop.f32.mrf.mxu0
    %v763 = vpop.f32.mrf.mxu0
    %v764 = vpop.f32.mrf.mxu0
    %765 = vdwg.mxu0
    %v766 = vadd.f32 %v715, %v761
    %v767 = vadd.f32 %v766, %v58
    %v768 = vxor.u32 %v767, 2147483648
    %v769 = vmul.f32 %v768, 1.442695
    %v770 = vpow.pop %v769
    %v771 = vadd.f32 %v770, 1.0
    %v772 = vrcp.pop %v771
    %v773 = vmul.f32 1.0, %v772
    %v774 = vtanh.pop %v767
    %v775 = vmul.f32 %v773, %v639
    %777 = vrot.lane.b32.xlu0 %v774, 64
    %v778 = vpop.permute.xlu0 %777
    %v780 = vmul.f32 %v773, %v778
    %782 = vrot.lane.b32.xlu0 %v780, 32
    %v783 = vpop.permute.xlu0 %782
    %v785 = vadd.f32 %v775, %v783
    %v786 = vtanh.pop %v785
    %788 = vrot.lane.b32.xlu0 %v786, 64
    %v789 = vpop.permute.xlu0 %788
    %v791 = vmul.f32 %v773, %v789
    %v792 = vadd.f32 %v175, %v713
    %v793 = vxor.u32 %v792, 2147483648
    %v794 = vmul.f32 %v793, 1.442695
    %v795 = vpow.pop %v794
    %v796 = vadd.f32 %v795, 1.0
    %v797 = vrcp.pop %v796
    %v798 = vmul.f32 1.0, %v797
    %v799 = vtanh.pop %v792
    %v800 = vmul.f32 %v798, %v664
    %802 = vrot.lane.b32.xlu0 %v799, 64
    %v803 = vpop.permute.xlu0 %802
    %v805 = vmul.f32 %v798, %v803
    %807 = vrot.lane.b32.xlu0 %v805, 32
    %v808 = vpop.permute.xlu0 %807
    %v810 = vadd.f32 %v800, %v808
    %v811 = vtanh.pop %v810
    %813 = vrot.lane.b32.xlu0 %v811, 64
    %v814 = vpop.permute.xlu0 %813
    %v816 = vmul.f32 %v798, %v814
    %v817 = vpack.c.bf16 %v816, %v816
    %819 = vrot.lane.b32.xlu0 %v817, 32
    %v820 = vpop.permute.xlu0 %819
    %v822 = vsel %vm228, %v820, 0
    %824 = vmatprep.subr.bf16.mxu0 0
    %825 = vmatpush1.bf16.msra.mxu0 0
    %826 = vmatprep.subr.bf16.mxu0 0
    %827 = vmatpush1.bf16.msra.mxu0 0
    %828 = vmatprep.subr.bf16.mxu0 0
    %829 = vmatpush1.bf16.msra.mxu0 0
    %830 = vmatprep.subr.bf16.mxu0 0
    %831 = vmatpush1.bf16.msra.mxu0 0
    %832 = vmatprep.subr.bf16.mxu0 0
    %833 = vmatpush1.bf16.msra.mxu0 0
    %834 = vmatprep.subr.bf16.mxu0 0
    %835 = vmatpush1.bf16.msra.mxu0 0
    %836 = vmatprep.subr.bf16.mxu0 %v223
    %837 = vmatpush1.bf16.msra.mxu0 %v222
    %838 = vmatprep.subr.bf16.mxu0 %v221
    %839 = vmatpush1.bf16.msra.mxu0 %v220
    %840 = vmatprep.subr.bf16.mxu0 0
    %841 = vmatpush2.bf16.msra.mxu0 0
    %842 = vmatprep.subr.bf16.mxu0 0
    %843 = vmatpush2.bf16.msra.mxu0 0
    %844 = vmatprep.subr.bf16.mxu0 0
    %845 = vmatpush2.bf16.msra.mxu0 0
    %846 = vmatprep.subr.bf16.mxu0 0
    %847 = vmatpush2.bf16.msra.mxu0 0
    %848 = vmatprep.subr.bf16.mxu0 0
    %849 = vmatpush2.bf16.msra.mxu0 0
    %850 = vmatprep.subr.bf16.mxu0 0
    %851 = vmatpush2.bf16.msra.mxu0 0
    %852 = vmatprep.subr.bf16.mxu0 0
    %853 = vmatpush2.bf16.msra.mxu0 0
    %854 = vmatprep.subr.bf16.mxu0 0
    %855 = vmatpush2.bf16.msra.mxu0 0
    %856 = vmatprep.mubr.bf16.mxu0 0
    %857 = vmatmul.mubr.bf16.gmra.mxu0 %v822
    %v858 = vpop.f32.mrf.mxu0
    %v859 = vadd.f32 0.0, %v858
    %v860 = vpop.f32.mrf.mxu0
    %v861 = vadd.f32 0.0, %v860
    %v862 = vpop.f32.mrf.mxu0
    %v863 = vpop.f32.mrf.mxu0
    %864 = vdwg.mxu0
    %v865 = vpack.c.bf16 %v791, %v791
    %867 = vrot.lane.b32.xlu0 %v865, 32
    %v868 = vpop.permute.xlu0 %867
    %v870 = vsel %vm228, %v868, 0
    %872 = vmatprep.subr.bf16.mxu0 0
    %873 = vmatpush1.bf16.msra.mxu0 0
    %874 = vmatprep.subr.bf16.mxu0 0
    %875 = vmatpush1.bf16.msra.mxu0 0
    %876 = vmatprep.subr.bf16.mxu0 0
    %877 = vmatpush1.bf16.msra.mxu0 0
    %878 = vmatprep.subr.bf16.mxu0 0
    %879 = vmatpush1.bf16.msra.mxu0 0
    %880 = vmatprep.subr.bf16.mxu0 0
    %881 = vmatpush1.bf16.msra.mxu0 0
    %882 = vmatprep.subr.bf16.mxu0 0
    %883 = vmatpush1.bf16.msra.mxu0 0
    %884 = vmatprep.subr.bf16.mxu0 0
    %885 = vmatpush1.bf16.msra.mxu0 %v282
    %886 = vmatprep.subr.bf16.mxu0 0
    %887 = vmatpush1.bf16.msra.mxu0 %v281
    %888 = vmatprep.subr.bf16.mxu0 0
    %889 = vmatpush2.bf16.msra.mxu0 0
    %890 = vmatprep.subr.bf16.mxu0 0
    %891 = vmatpush2.bf16.msra.mxu0 0
    %892 = vmatprep.subr.bf16.mxu0 0
    %893 = vmatpush2.bf16.msra.mxu0 0
    %894 = vmatprep.subr.bf16.mxu0 0
    %895 = vmatpush2.bf16.msra.mxu0 0
    %896 = vmatprep.subr.bf16.mxu0 0
    %897 = vmatpush2.bf16.msra.mxu0 0
    %898 = vmatprep.subr.bf16.mxu0 0
    %899 = vmatpush2.bf16.msra.mxu0 0
    %900 = vmatprep.subr.bf16.mxu0 0
    %901 = vmatpush2.bf16.msra.mxu0 0
    %902 = vmatprep.subr.bf16.mxu0 0
    %903 = vmatpush2.bf16.msra.mxu0 0
    %904 = vmatprep.mubr.bf16.mxu0 0
    %905 = vmatmul.mubr.bf16.gmra.mxu0 %v870
    %v906 = vpop.f32.mrf.mxu0
    %v907 = vadd.f32 0.0, %v906
    %v908 = vpop.f32.mrf.mxu0
    %v909 = vpop.f32.mrf.mxu0
    %v910 = vpop.f32.mrf.mxu0
    %911 = vdwg.mxu0
    %v912 = vadd.f32 %v861, %v907
    %v913 = vadd.f32 %v912, %v58
    %v914 = vxor.u32 %v913, 2147483648
    %v915 = vmul.f32 %v914, 1.442695
    %v916 = vpow.pop %v915
    %v917 = vadd.f32 %v916, 1.0
    %v918 = vrcp.pop %v917
    %v919 = vmul.f32 1.0, %v918
    %v920 = vtanh.pop %v913
    %v921 = vmul.f32 %v919, %v785
    %923 = vrot.lane.b32.xlu0 %v920, 64
    %v924 = vpop.permute.xlu0 %923
    %v926 = vmul.f32 %v919, %v924
    %928 = vrot.lane.b32.xlu0 %v926, 32
    %v929 = vpop.permute.xlu0 %928
    %v931 = vadd.f32 %v921, %v929
    %v932 = vtanh.pop %v931
    %934 = vrot.lane.b32.xlu0 %v932, 64
    %v935 = vpop.permute.xlu0 %934
    %v937 = vmul.f32 %v919, %v935
    %v938 = vadd.f32 %v176, %v859
    %v939 = vxor.u32 %v938, 2147483648
    %v940 = vmul.f32 %v939, 1.442695
    %v941 = vpow.pop %v940
    %v942 = vadd.f32 %v941, 1.0
    %v943 = vrcp.pop %v942
    %v944 = vmul.f32 1.0, %v943
    %v945 = vtanh.pop %v938
    %v946 = vmul.f32 %v944, %v810
    %948 = vrot.lane.b32.xlu0 %v945, 64
    %v949 = vpop.permute.xlu0 %948
    %v951 = vmul.f32 %v944, %v949
    %953 = vrot.lane.b32.xlu0 %v951, 32
    %v954 = vpop.permute.xlu0 %953
    %v956 = vadd.f32 %v946, %v954
    %v957 = vtanh.pop %v956
    %959 = vrot.lane.b32.xlu0 %v957, 64
    %v960 = vpop.permute.xlu0 %959
    %v962 = vmul.f32 %v944, %v960
    %v963 = vpack.c.bf16 %v962, %v962
    %965 = vrot.lane.b32.xlu0 %v963, 32
    %v966 = vpop.permute.xlu0 %965
    %v968 = vsel %vm228, %v966, 0
    %970 = vmatprep.subr.bf16.mxu0 0
    %971 = vmatpush1.bf16.msra.mxu0 0
    %972 = vmatprep.subr.bf16.mxu0 0
    %973 = vmatpush1.bf16.msra.mxu0 0
    %974 = vmatprep.subr.bf16.mxu0 0
    %975 = vmatpush1.bf16.msra.mxu0 0
    %976 = vmatprep.subr.bf16.mxu0 0
    %977 = vmatpush1.bf16.msra.mxu0 0
    %978 = vmatprep.subr.bf16.mxu0 0
    %979 = vmatpush1.bf16.msra.mxu0 0
    %980 = vmatprep.subr.bf16.mxu0 0
    %981 = vmatpush1.bf16.msra.mxu0 0
    %982 = vmatprep.subr.bf16.mxu0 %v223
    %983 = vmatpush1.bf16.msra.mxu0 %v222
    %984 = vmatprep.subr.bf16.mxu0 %v221
    %985 = vmatpush1.bf16.msra.mxu0 %v220
    %986 = vmatprep.subr.bf16.mxu0 0
    %987 = vmatpush2.bf16.msra.mxu0 0
    %988 = vmatprep.subr.bf16.mxu0 0
    %989 = vmatpush2.bf16.msra.mxu0 0
    %990 = vmatprep.subr.bf16.mxu0 0
    %991 = vmatpush2.bf16.msra.mxu0 0
    %992 = vmatprep.subr.bf16.mxu0 0
    %993 = vmatpush2.bf16.msra.mxu0 0
    %994 = vmatprep.subr.bf16.mxu0 0
    %995 = vmatpush2.bf16.msra.mxu0 0
    %996 = vmatprep.subr.bf16.mxu0 0
    %997 = vmatpush2.bf16.msra.mxu0 0
    %998 = vmatprep.subr.bf16.mxu0 0
    %999 = vmatpush2.bf16.msra.mxu0 0
    %1000 = vmatprep.subr.bf16.mxu0 0
    %1001 = vmatpush2.bf16.msra.mxu0 0
    %1002 = vmatprep.mubr.bf16.mxu0 0
    %1003 = vmatmul.mubr.bf16.gmra.mxu0 %v968
    %v1004 = vpop.f32.mrf.mxu0
    %v1005 = vadd.f32 0.0, %v1004
    %v1006 = vpop.f32.mrf.mxu0
    %v1007 = vadd.f32 0.0, %v1006
    %v1008 = vpop.f32.mrf.mxu0
    %v1009 = vpop.f32.mrf.mxu0
    %1010 = vdwg.mxu0
    %v1011 = vpack.c.bf16 %v937, %v937
    %1013 = vrot.lane.b32.xlu0 %v1011, 32
    %v1014 = vpop.permute.xlu0 %1013
    %v1016 = vsel %vm228, %v1014, 0
    %1018 = vmatprep.subr.bf16.mxu0 0
    %1019 = vmatpush1.bf16.msra.mxu0 0
    %1020 = vmatprep.subr.bf16.mxu0 0
    %1021 = vmatpush1.bf16.msra.mxu0 0
    %1022 = vmatprep.subr.bf16.mxu0 0
    %1023 = vmatpush1.bf16.msra.mxu0 0
    %1024 = vmatprep.subr.bf16.mxu0 0
    %1025 = vmatpush1.bf16.msra.mxu0 0
    %1026 = vmatprep.subr.bf16.mxu0 0
    %1027 = vmatpush1.bf16.msra.mxu0 0
    %1028 = vmatprep.subr.bf16.mxu0 0
    %1029 = vmatpush1.bf16.msra.mxu0 0
    %1030 = vmatprep.subr.bf16.mxu0 0
    %1031 = vmatpush1.bf16.msra.mxu0 %v282
    %1032 = vmatprep.subr.bf16.mxu0 0
    %1033 = vmatpush1.bf16.msra.mxu0 %v281
    %1034 = vmatprep.subr.bf16.mxu0 0
    %1035 = vmatpush2.bf16.msra.mxu0 0
    %1036 = vmatprep.subr.bf16.mxu0 0
    %1037 = vmatpush2.bf16.msra.mxu0 0
    %1038 = vmatprep.subr.bf16.mxu0 0
    %1039 = vmatpush2.bf16.msra.mxu0 0
    %1040 = vmatprep.subr.bf16.mxu0 0
    %1041 = vmatpush2.bf16.msra.mxu0 0
    %1042 = vmatprep.subr.bf16.mxu0 0
    %1043 = vmatpush2.bf16.msra.mxu0 0
    %1044 = vmatprep.subr.bf16.mxu0 0
    %1045 = vmatpush2.bf16.msra.mxu0 0
    %1046 = vmatprep.subr.bf16.mxu0 0
    %1047 = vmatpush2.bf16.msra.mxu0 0
    %1048 = vmatprep.subr.bf16.mxu0 0
    %1049 = vmatpush2.bf16.msra.mxu0 0
    %1050 = vmatprep.mubr.bf16.mxu0 0
    %1051 = vmatmul.mubr.bf16.gmra.mxu0 %v1016
    %v1052 = vpop.f32.mrf.mxu0
    %v1053 = vadd.f32 0.0, %v1052
    %v1054 = vpop.f32.mrf.mxu0
    %v1055 = vpop.f32.mrf.mxu0
    %v1056 = vpop.f32.mrf.mxu0
    %1057 = vdwg.mxu0
    %v1058 = vadd.f32 %v1007, %v1053
    %v1059 = vadd.f32 %v1058, %v58
    %v1060 = vxor.u32 %v1059, 2147483648
    %v1061 = vmul.f32 %v1060, 1.442695
    %v1062 = vpow.pop %v1061
    %v1063 = vadd.f32 %v1062, 1.0
    %v1064 = vrcp.pop %v1063
    %v1065 = vmul.f32 1.0, %v1064
    %v1066 = vtanh.pop %v1059
    %v1067 = vmul.f32 %v1065, %v931
    %1069 = vrot.lane.b32.xlu0 %v1066, 64
    %v1070 = vpop.permute.xlu0 %1069
    %v1072 = vmul.f32 %v1065, %v1070
    %1074 = vrot.lane.b32.xlu0 %v1072, 32
    %v1075 = vpop.permute.xlu0 %1074
    %v1077 = vadd.f32 %v1067, %v1075
    %v1078 = vtanh.pop %v1077
    %1080 = vrot.lane.b32.xlu0 %v1078, 64
    %v1081 = vpop.permute.xlu0 %1080
    %v1083 = vmul.f32 %v1065, %v1081
    %v1084 = vadd.f32 %v177, %v1005
    %v1085 = vxor.u32 %v1084, 2147483648
    %v1086 = vmul.f32 %v1085, 1.442695
    %v1087 = vpow.pop %v1086
    %v1088 = vadd.f32 %v1087, 1.0
    %v1089 = vrcp.pop %v1088
    %v1090 = vmul.f32 1.0, %v1089
    %v1091 = vtanh.pop %v1084
    %v1092 = vmul.f32 %v1090, %v956
    %1094 = vrot.lane.b32.xlu0 %v1091, 64
    %v1095 = vpop.permute.xlu0 %1094
    %v1097 = vmul.f32 %v1090, %v1095
    %1099 = vrot.lane.b32.xlu0 %v1097, 32
    %v1100 = vpop.permute.xlu0 %1099
    %v1102 = vadd.f32 %v1092, %v1100
    %v1103 = vtanh.pop %v1102
    %1105 = vrot.lane.b32.xlu0 %v1103, 64
    %v1106 = vpop.permute.xlu0 %1105
    %v1108 = vmul.f32 %v1090, %v1106
    %v1109 = vpack.c.bf16 %v1108, %v1108
    %1111 = vrot.lane.b32.xlu0 %v1109, 32
    %v1112 = vpop.permute.xlu0 %1111
    %v1114 = vsel %vm228, %v1112, 0
    %1116 = vmatprep.subr.bf16.mxu0 0
    %1117 = vmatpush1.bf16.msra.mxu0 0
    %1118 = vmatprep.subr.bf16.mxu0 0
    %1119 = vmatpush1.bf16.msra.mxu0 0
    %1120 = vmatprep.subr.bf16.mxu0 0
    %1121 = vmatpush1.bf16.msra.mxu0 0
    %1122 = vmatprep.subr.bf16.mxu0 0
    %1123 = vmatpush1.bf16.msra.mxu0 0
    %1124 = vmatprep.subr.bf16.mxu0 0
    %1125 = vmatpush1.bf16.msra.mxu0 0
    %1126 = vmatprep.subr.bf16.mxu0 0
    %1127 = vmatpush1.bf16.msra.mxu0 0
    %1128 = vmatprep.subr.bf16.mxu0 %v223
    %1129 = vmatpush1.bf16.msra.mxu0 %v222
    %1130 = vmatprep.subr.bf16.mxu0 %v221
    %1131 = vmatpush1.bf16.msra.mxu0 %v220
    %1132 = vmatprep.subr.bf16.mxu0 0
    %1133 = vmatpush2.bf16.msra.mxu0 0
    %1134 = vmatprep.subr.bf16.mxu0 0
    %1135 = vmatpush2.bf16.msra.mxu0 0
    %1136 = vmatprep.subr.bf16.mxu0 0
    %1137 = vmatpush2.bf16.msra.mxu0 0
    %1138 = vmatprep.subr.bf16.mxu0 0
    %1139 = vmatpush2.bf16.msra.mxu0 0
    %1140 = vmatprep.subr.bf16.mxu0 0
    %1141 = vmatpush2.bf16.msra.mxu0 0
    %1142 = vmatprep.subr.bf16.mxu0 0
    %1143 = vmatpush2.bf16.msra.mxu0 0
    %1144 = vmatprep.subr.bf16.mxu0 0
    %1145 = vmatpush2.bf16.msra.mxu0 0
    %1146 = vmatprep.subr.bf16.mxu0 0
    %1147 = vmatpush2.bf16.msra.mxu0 0
    %1148 = vmatprep.mubr.bf16.mxu0 0
    %1149 = vmatmul.mubr.bf16.gmra.mxu0 %v1114
    %v1150 = vpop.f32.mrf.mxu0
    %v1151 = vadd.f32 0.0, %v1150
    %v1152 = vpop.f32.mrf.mxu0
    %v1153 = vadd.f32 0.0, %v1152
    %v1154 = vpop.f32.mrf.mxu0
    %v1155 = vpop.f32.mrf.mxu0
    %1156 = vdwg.mxu0
    %v1157 = vpack.c.bf16 %v1083, %v1083
    %1159 = vrot.lane.b32.xlu0 %v1157, 32
    %v1160 = vpop.permute.xlu0 %1159
    %v1162 = vsel %vm228, %v1160, 0
    %1164 = vmatprep.subr.bf16.mxu0 0
    %1165 = vmatpush1.bf16.msra.mxu0 0
    %1166 = vmatprep.subr.bf16.mxu0 0
    %1167 = vmatpush1.bf16.msra.mxu0 0
    %1168 = vmatprep.subr.bf16.mxu0 0
    %1169 = vmatpush1.bf16.msra.mxu0 0
    %1170 = vmatprep.subr.bf16.mxu0 0
    %1171 = vmatpush1.bf16.msra.mxu0 0
    %1172 = vmatprep.subr.bf16.mxu0 0
    %1173 = vmatpush1.bf16.msra.mxu0 0
    %1174 = vmatprep.subr.bf16.mxu0 0
    %1175 = vmatpush1.bf16.msra.mxu0 0
    %1176 = vmatprep.subr.bf16.mxu0 0
    %1177 = vmatpush1.bf16.msra.mxu0 %v282
    %1178 = vmatprep.subr.bf16.mxu0 0
    %1179 = vmatpush1.bf16.msra.mxu0 %v281
    %1180 = vmatprep.subr.bf16.mxu0 0
    %1181 = vmatpush2.bf16.msra.mxu0 0
    %1182 = vmatprep.subr.bf16.mxu0 0
    %1183 = vmatpush2.bf16.msra.mxu0 0
    %1184 = vmatprep.subr.bf16.mxu0 0
    %1185 = vmatpush2.bf16.msra.mxu0 0
    %1186 = vmatprep.subr.bf16.mxu0 0
    %1187 = vmatpush2.bf16.msra.mxu0 0
    %1188 = vmatprep.subr.bf16.mxu0 0
    %1189 = vmatpush2.bf16.msra.mxu0 0
    %1190 = vmatprep.subr.bf16.mxu0 0
    %1191 = vmatpush2.bf16.msra.mxu0 0
    %1192 = vmatprep.subr.bf16.mxu0 0
    %1193 = vmatpush2.bf16.msra.mxu0 0
    %1194 = vmatprep.subr.bf16.mxu0 0
    %1195 = vmatpush2.bf16.msra.mxu0 0
    %1196 = vmatprep.mubr.bf16.mxu0 0
    %1197 = vmatmul.mubr.bf16.gmra.mxu0 %v1162
    %v1198 = vpop.f32.mrf.mxu0
    %v1199 = vadd.f32 0.0, %v1198
    %v1200 = vpop.f32.mrf.mxu0
    %v1201 = vpop.f32.mrf.mxu0
    %v1202 = vpop.f32.mrf.mxu0
    %1203 = vdwg.mxu0
    %v1204 = vadd.f32 %v1153, %v1199
    %v1205 = vadd.f32 %v1204, %v58
    %v1206 = vxor.u32 %v1205, 2147483648
    %v1207 = vmul.f32 %v1206, 1.442695
    %v1208 = vpow.pop %v1207
    %v1209 = vadd.f32 %v1208, 1.0
    %v1210 = vrcp.pop %v1209
    %v1211 = vmul.f32 1.0, %v1210
    %v1212 = vtanh.pop %v1205
    %v1213 = vmul.f32 %v1211, %v1077
    %1215 = vrot.lane.b32.xlu0 %v1212, 64
    %v1216 = vpop.permute.xlu0 %1215
    %v1218 = vmul.f32 %v1211, %v1216
    %1220 = vrot.lane.b32.xlu0 %v1218, 32
    %v1221 = vpop.permute.xlu0 %1220
    %v1223 = vadd.f32 %v1213, %v1221
    %v1224 = vtanh.pop %v1223
    %1226 = vrot.lane.b32.xlu0 %v1224, 64
    %v1227 = vpop.permute.xlu0 %1226
    %v1229 = vmul.f32 %v1211, %v1227
    %v1230 = vadd.f32 %v178, %v1151
    %v1231 = vxor.u32 %v1230, 2147483648
    %v1232 = vmul.f32 %v1231, 1.442695
    %v1233 = vpow.pop %v1232
    %v1234 = vadd.f32 %v1233, 1.0
    %v1235 = vrcp.pop %v1234
    %v1236 = vmul.f32 1.0, %v1235
    %v1237 = vtanh.pop %v1230
    %v1238 = vmul.f32 %v1236, %v1102
    %1240 = vrot.lane.b32.xlu0 %v1237, 64
    %v1241 = vpop.permute.xlu0 %1240
    %v1243 = vmul.f32 %v1236, %v1241
    %1245 = vrot.lane.b32.xlu0 %v1243, 32
    %v1246 = vpop.permute.xlu0 %1245
    %v1248 = vadd.f32 %v1238, %v1246
    %v1249 = vtanh.pop %v1248
    %1251 = vrot.lane.b32.xlu0 %v1249, 64
    %v1252 = vpop.permute.xlu0 %1251
    %v1254 = vmul.f32 %v1236, %v1252
    %v1255 = vpack.c.bf16 %v1254, %v1254
    %1257 = vrot.lane.b32.xlu0 %v1255, 32
    %v1258 = vpop.permute.xlu0 %1257
    %v1260 = vsel %vm228, %v1258, 0
    %1262 = vmatprep.subr.bf16.mxu0 0
    %1263 = vmatpush1.bf16.msra.mxu0 0
    %1264 = vmatprep.subr.bf16.mxu0 0
    %1265 = vmatpush1.bf16.msra.mxu0 0
    %1266 = vmatprep.subr.bf16.mxu0 0
    %1267 = vmatpush1.bf16.msra.mxu0 0
    %1268 = vmatprep.subr.bf16.mxu0 0
    %1269 = vmatpush1.bf16.msra.mxu0 0
    %1270 = vmatprep.subr.bf16.mxu0 0
    %1271 = vmatpush1.bf16.msra.mxu0 0
    %1272 = vmatprep.subr.bf16.mxu0 0
    %1273 = vmatpush1.bf16.msra.mxu0 0
    %1274 = vmatprep.subr.bf16.mxu0 %v223
    %1275 = vmatpush1.bf16.msra.mxu0 %v222
    %1276 = vmatprep.subr.bf16.mxu0 %v221
    %1277 = vmatpush1.bf16.msra.mxu0 %v220
    %1278 = vmatprep.subr.bf16.mxu0 0
    %1279 = vmatpush2.bf16.msra.mxu0 0
    %1280 = vmatprep.subr.bf16.mxu0 0
    %1281 = vmatpush2.bf16.msra.mxu0 0
    %1282 = vmatprep.subr.bf16.mxu0 0
    %1283 = vmatpush2.bf16.msra.mxu0 0
    %1284 = vmatprep.subr.bf16.mxu0 0
    %1285 = vmatpush2.bf16.msra.mxu0 0
    %1286 = vmatprep.subr.bf16.mxu0 0
    %1287 = vmatpush2.bf16.msra.mxu0 0
    %1288 = vmatprep.subr.bf16.mxu0 0
    %1289 = vmatpush2.bf16.msra.mxu0 0
    %1290 = vmatprep.subr.bf16.mxu0 0
    %1291 = vmatpush2.bf16.msra.mxu0 0
    %1292 = vmatprep.subr.bf16.mxu0 0
    %1293 = vmatpush2.bf16.msra.mxu0 0
    %1294 = vmatprep.mubr.bf16.mxu0 0
    %1295 = vmatmul.mubr.bf16.gmra.mxu0 %v1260
    %v1296 = vpop.f32.mrf.mxu0
    %v1297 = vpop.f32.mrf.mxu0
    %v1298 = vadd.f32 0.0, %v1297
    %v1299 = vpop.f32.mrf.mxu0
    %v1300 = vpop.f32.mrf.mxu0
    %1301 = vdwg.mxu0
    %v1302 = vpack.c.bf16 %v1229, %v1229
    %1304 = vrot.lane.b32.xlu0 %v1302, 32
    %v1305 = vpop.permute.xlu0 %1304
    %v1307 = vsel %vm228, %v1305, 0
    %1309 = vmatprep.subr.bf16.mxu0 0
    %1310 = vmatpush1.bf16.msra.mxu0 0
    %1311 = vmatprep.subr.bf16.mxu0 0
    %1312 = vmatpush1.bf16.msra.mxu0 0
    %1313 = vmatprep.subr.bf16.mxu0 0
    %1314 = vmatpush1.bf16.msra.mxu0 0
    %1315 = vmatprep.subr.bf16.mxu0 0
    %1316 = vmatpush1.bf16.msra.mxu0 0
    %1317 = vmatprep.subr.bf16.mxu0 0
    %1318 = vmatpush1.bf16.msra.mxu0 0
    %1319 = vmatprep.subr.bf16.mxu0 0
    %1320 = vmatpush1.bf16.msra.mxu0 0
    %1321 = vmatprep.subr.bf16.mxu0 0
    %1322 = vmatpush1.bf16.msra.mxu0 %v282
    %1323 = vmatprep.subr.bf16.mxu0 0
    %1324 = vmatpush1.bf16.msra.mxu0 %v281
    %1325 = vmatprep.subr.bf16.mxu0 0
    %1326 = vmatpush2.bf16.msra.mxu0 0
    %1327 = vmatprep.subr.bf16.mxu0 0
    %1328 = vmatpush2.bf16.msra.mxu0 0
    %1329 = vmatprep.subr.bf16.mxu0 0
    %1330 = vmatpush2.bf16.msra.mxu0 0
    %1331 = vmatprep.subr.bf16.mxu0 0
    %1332 = vmatpush2.bf16.msra.mxu0 0
    %1333 = vmatprep.subr.bf16.mxu0 0
    %1334 = vmatpush2.bf16.msra.mxu0 0
    %1335 = vmatprep.subr.bf16.mxu0 0
    %1336 = vmatpush2.bf16.msra.mxu0 0
    %1337 = vmatprep.subr.bf16.mxu0 0
    %1338 = vmatpush2.bf16.msra.mxu0 0
    %1339 = vmatprep.subr.bf16.mxu0 0
    %1340 = vmatpush2.bf16.msra.mxu0 0
    %1341 = vmatprep.mubr.bf16.mxu0 0
    %1342 = vmatmul.mubr.bf16.gmra.mxu0 %v1307
    %v1343 = vpop.f32.mrf.mxu0
    %v1344 = vadd.f32 0.0, %v1343
    %v1345 = vpop.f32.mrf.mxu0
    %v1346 = vpop.f32.mrf.mxu0
    %v1347 = vpop.f32.mrf.mxu0
    %1348 = vdwg.mxu0
    %v1349 = vadd.f32 %v1298, %v1344
    %v1350 = vadd.f32 %v1349, %v58
    %v1351 = vxor.u32 %v1350, 2147483648
    %v1352 = vmul.f32 %v1351, 1.442695
    %v1353 = vpow.pop %v1352
    %v1354 = vadd.f32 %v1353, 1.0
    %v1355 = vrcp.pop %v1354
    %v1356 = vmul.f32 1.0, %v1355
    %v1357 = vtanh.pop %v1350
    %v1358 = vmul.f32 %v1356, %v1223
    %1360 = vrot.lane.b32.xlu0 %v1357, 64
    %v1361 = vpop.permute.xlu0 %1360
    %v1363 = vmul.f32 %v1356, %v1361
    %1365 = vrot.lane.b32.xlu0 %v1363, 32
    %v1366 = vpop.permute.xlu0 %1365
    %v1368 = vadd.f32 %v1358, %v1366
    %v1369 = vtanh.pop %v1368
    %1371 = vrot.lane.b32.xlu0 %v1369, 64
    %v1372 = vpop.permute.xlu0 %1371
    %v1374 = vmul.f32 %v1356, %v1372
    %v1375 = vpack.c.bf16 %v1374, %v1374
    %v1377 = vlaneseq
    %v1378 = vshrl.u32 %v1377, 7
    %v1379 = vsub.s32 0, %v1378
    %v1380 = vrot.slane %v52, %v1379
    %1383 = vrot.lane.b32.xlu0 %v1375, 32
    %v1384 = vpop.permute.xlu0 %1383
    %v1389 = vunpack.c.l.b16 %v48
    %v1390 = vunpack.c.l.b16 %v49
    %v1391 = vunpack.c.l.b16 %v50
    %v1392 = vunpack.c.l.b16 %v51
    %v1393 = vpack.c.b16 %v1390, %v1389
    %v1394 = vpack.c.b16 %v1392, %v1391
    %v1398 = vsel %vm228, %v1384, 0
    %1400 = vmatprep.subr.bf16.mxu0 0
    %1401 = vmatpush1.bf16.msra.mxu0 0
    %1402 = vmatprep.subr.bf16.mxu0 0
    %1403 = vmatpush1.bf16.msra.mxu0 0
    %1404 = vmatprep.subr.bf16.mxu0 0
    %1405 = vmatpush1.bf16.msra.mxu0 0
    %1406 = vmatprep.subr.bf16.mxu0 0
    %1407 = vmatpush1.bf16.msra.mxu0 0
    %1408 = vmatprep.subr.bf16.mxu0 0
    %1409 = vmatpush1.bf16.msra.mxu0 0
    %1410 = vmatprep.subr.bf16.mxu0 0
    %1411 = vmatpush1.bf16.msra.mxu0 0
    %1412 = vmatprep.subr.bf16.mxu0 0
    %1413 = vmatpush1.bf16.msra.mxu0 %v1394
    %1414 = vmatprep.subr.bf16.mxu0 0
    %1415 = vmatpush1.bf16.msra.mxu0 %v1393
    %1416 = vmatprep.subr.bf16.mxu0 0
    %1417 = vmatpush2.bf16.msra.mxu0 0
    %1418 = vmatprep.subr.bf16.mxu0 0
    %1419 = vmatpush2.bf16.msra.mxu0 0
    %1420 = vmatprep.subr.bf16.mxu0 0
    %1421 = vmatpush2.bf16.msra.mxu0 0
    %1422 = vmatprep.subr.bf16.mxu0 0
    %1423 = vmatpush2.bf16.msra.mxu0 0
    %1424 = vmatprep.subr.bf16.mxu0 0
    %1425 = vmatpush2.bf16.msra.mxu0 0
    %1426 = vmatprep.subr.bf16.mxu0 0
    %1427 = vmatpush2.bf16.msra.mxu0 0
    %1428 = vmatprep.subr.bf16.mxu0 0
    %1429 = vmatpush2.bf16.msra.mxu0 0
    %1430 = vmatprep.subr.bf16.mxu0 0
    %1431 = vmatpush2.bf16.msra.mxu0 0
    %1432 = vmatprep.mubr.bf16.mxu0 0
    %1433 = vmatmul.mubr.bf16.gmra.mxu0 %v1398
    %v1434 = vpop.f32.mrf.mxu0
    %v1435 = vadd.f32 %v1380, %v1434
    %v1436 = vpop.f32.mrf.mxu0
    %v1437 = vpop.f32.mrf.mxu0
    %v1438 = vpop.f32.mrf.mxu0
    %1439 = vdwg.mxu0
    %1440 = vst [vmem:[#allocation2] sm:$0xff] %v1435
    // Predicated region
    $region34: #{tpu_custom_call.1} parent=1 // pred_check
      _
    $region35: #{tpu_custom_call.1} parent=1 // pred_check_branch
      %1442 = sbr.rel (0) target = $region37
    $region36: #{tpu_custom_call.1} parent=1 // pred_region
      %s1444 = ssub.s32 128, 128
      %1445 = vsyncadd [#allocation3], %s1444
      %s1447 = sshll.u32 [#allocation2], 4
      %s1448 = int_to_ptr.vmem [resolvable:$true] %s1447
      %1450 = dma.vmem_to_hbm [thread:$0]  %s1448, 128, %s8, [#allocation3]
    $region37: #{tpu_custom_call.1} parent=1 // pred_fallthru
      _
    // Predicated region
    $region38: #{tpu_custom_call.1} parent=1 // pred_check
      _
    $region39: #{tpu_custom_call.1} parent=1 // pred_check_branch
      %1452 = sbr.rel (0) target = $region41
    $region40: #{tpu_custom_call.1} parent=1 // pred_region
      %1453 = dma.done [#allocation3], 128
    $region41: #{tpu_custom_call.1} parent=1 // pred_fallthru
      _
    %1454 = vsyncpa [#allocation3], 1

</llo_original>
